<compile_context>
chip_gen: v7x
topology: tpu7x:2x2x1
jax: 0.10.0
libtpu: 0.0.40
codegen_flags: <defaults>
</compile_context>

<pallas_src>
import functools

import jax
import jax.numpy as jnp
from jax.experimental import pallas as pl
from jax.experimental.pallas import tpu as pltpu


def _model_kernel(x_ref, wconv_ref, bconv_ref, mask_ref, whead_ref, bhead_ref,
                  out_ref, slab_ref, *, kh, kw, c, img_w, field, batch_tile):
    # x_ref:     (1, C, tb*field + pad)   batch tile, images concatenated on lanes
    # wconv_ref: (O, kh*kw*C)             conv weights, row order (i, j, c)
    # bconv_ref: (O, 1)
    # mask_ref:  (1, tb*field)            1/(OH*OW) at valid conv positions, else 0
    # whead_ref: (heads, O)
    # bhead_ref: (heads, 1)
    # out_ref:   (1, heads, tb)
    # slab_ref:  VMEM scratch (kh*kw*C, tb*field)
    n_shift = kh * kw
    tbf = batch_tile * field

    # Stage the kh*kw shifted windows of the whole tile; each copy is one big
    # lane-dense slice feeding a single matmul (not 9 tiny matmuls per image).
    for s in range(n_shift):
        i, j = divmod(s, kw)
        slab_ref[pl.ds(s * c, c), :] = x_ref[0, :, pl.ds(i * img_w + j, tbf)]

    # Conv2d for every image in the tile in ONE MXU matmul: (O,27)@(27,tb*field).
    conv = jnp.dot(wconv_ref[...], slab_ref[...],
                   preferred_element_type=jnp.float32)            # (O, tb*field)

    # Bias + ReLU; the mask zeroes invalid / wrap-around positions and carries
    # the 1/(OH*OW) average-pool scale.
    masked = jnp.maximum(conv + bconv_ref[...], 0.0) * mask_ref[...]

    # AdaptiveAvgPool2d((1,1)): per-image lane reduction (256-aligned slices).
    pooled = jnp.concatenate(
        [jnp.sum(masked[:, b * field:(b + 1) * field], axis=1, keepdims=True)
         for b in range(batch_tile)], axis=1)                     # (O, tb)

    # Linear head: one (heads, O)@(O, tb) matmul per grid step.
    out_ht = jnp.dot(whead_ref[...], pooled,
                     preferred_element_type=jnp.float32) + bhead_ref[...]
    out_ref[0] = out_ht.astype(out_ref.dtype)                     # (heads, tb)


@functools.partial(jax.jit, static_argnames=("batch_tile",))
def model_forward(x, conv_w, conv_b, head_w, head_b, *, batch_tile=8):
    """x: (N, 3, H, W) f32. conv_w: (64, 3, 3, 3), conv_b: (64,),
    head_w: (10, 64), head_b: (10,). Returns (N, 10).
    batch_tile must be a multiple of 8."""
    n, c, h, w = x.shape
    o, _, kh, kw = conv_w.shape
    heads = head_w.shape[0]
    oh, ow = h - kh + 1, w - kw + 1
    field = h * w
    pad = (kh - 1) * w + (kw - 1)
    tb = batch_tile
    n_pad = -(-n // tb) * tb
    n_blocks = n_pad // tb
    tbf = tb * field

    # Batch-tile layout: images of one grid step concatenated along lanes
    # (channel-major), plus `pad` trailing zeros so every shifted window load
    # stays in-bounds.  Wrap-around reads only hit masked (invalid) positions.
    x_flat = x.reshape(n, c, field)
    x_flat = jnp.pad(x_flat, ((0, n_pad - n), (0, 0), (0, 0)))
    x_blocks = (x_flat.reshape(n_blocks, tb, c, field)
                      .transpose(0, 2, 1, 3)
                      .reshape(n_blocks, c, tbf))
    x_blocks = jnp.pad(x_blocks, ((0, 0), (0, 0), (0, pad)))

    # Conv weights as one (O, kh*kw*C) matrix matching the slab row order (i,j,c).
    wconv2 = jnp.transpose(conv_w, (0, 2, 3, 1)).reshape(o, kh * kw * c)
    bconv_col = conv_b.reshape(o, 1)

    # Valid conv positions (per image, tiled across the tile) with pool scale.
    pos = jnp.arange(field, dtype=jnp.int32)
    valid = ((pos % w) < ow) & ((pos // w) < oh)
    m = valid.astype(jnp.float32) / float(oh * ow)
    mask = jnp.tile(m, tb).reshape(1, tbf)

    bhead_col = head_b.reshape(heads, 1)

    flops = int(2 * n_pad * o * (kh * kw * c) * field + 2 * n_pad * heads * o)
    bytes_accessed = int(4 * (x_blocks.size + wconv2.size + o + mask.size
                              + head_w.size + heads + n_pad * heads))

    kernel = functools.partial(_model_kernel, kh=kh, kw=kw, c=c, img_w=w,
                               field=field, batch_tile=tb)
    out = pl.pallas_call(
        kernel,
        out_shape=jax.ShapeDtypeStruct((n_blocks, heads, tb), jnp.float32),
        grid=(n_blocks,),
        in_specs=[
            pl.BlockSpec((1, c, tbf + pad), lambda g: (g, 0, 0)),   # per-step tile
            pl.BlockSpec((o, kh * kw * c), lambda g: (0, 0)),       # resident weights
            pl.BlockSpec((o, 1), lambda g: (0, 0)),
            pl.BlockSpec((1, tbf), lambda g: (0, 0)),
            pl.BlockSpec((heads, o), lambda g: (0, 0)),
            pl.BlockSpec((heads, 1), lambda g: (0, 0)),
        ],
        out_specs=pl.BlockSpec((1, heads, tb), lambda g: (g, 0, 0)),
        scratch_shapes=[pltpu.VMEM((kh * kw * c, tbf), jnp.float32)],
        compiler_params=pltpu.CompilerParams(
            dimension_semantics=("parallel",)),
        cost_estimate=pl.CostEstimate(flops=flops, transcendentals=0,
                                      bytes_accessed=bytes_accessed),
    )(x_blocks, wconv2, bconv_col, mask, head_w, bhead_col)

    # (n_blocks, heads, tb) -> (N, heads); tiny host-side relayout inside jit.
    return out.transpose(0, 2, 1).reshape(n_pad, heads)[:n]


def _reference_forward(x, conv_w, conv_b, head_w, head_b):
    """Plain-JAX reference (lax conv) for the correctness check."""
    conv = jax.lax.conv_general_dilated(
        x, conv_w, window_strides=(1, 1), padding="VALID",
        dimension_numbers=("NCHW", "OIHW", "NCHW"))
    conv = conv + conv_b[None, :, None, None]
    conv = jnp.maximum(conv, 0.0)
    pooled = jnp.mean(conv, axis=(2, 3))                  # (N, 64)
    return pooled @ head_w.T + head_b[None, :]


if __name__ == "__main__":
    key = jax.random.PRNGKey(0)
    kx, kcw, kcb, khw, khb = jax.random.split(key, 5)

    N, C, H, W = 2, 3, 16, 16
    x = jax.random.normal(kx, (N, C, H, W), dtype=jnp.float32)

    # Deterministic parameter init (PyTorch-like uniform bounds).
    fan_in_conv = C * 3 * 3
    bc = 1.0 / jnp.sqrt(fan_in_conv)
    conv_w = jax.random.uniform(kcw, (64, C, 3, 3), jnp.float32, -bc, bc)
    conv_b = jax.random.uniform(kcb, (64,), jnp.float32, -bc, bc)

    bh = 1.0 / jnp.sqrt(64.0)
    head_w = jax.random.uniform(khw, (10, 64), jnp.float32, -bh, bh)
    head_b = jax.random.uniform(khb, (10,), jnp.float32, -bh, bh)

    out = model_forward(x, conv_w, conv_b, head_w, head_b)
    out = jax.block_until_ready(out)

    ref = _reference_forward(x, conv_w, conv_b, head_w, head_b)
    assert out.shape == (N, 10)
    assert jnp.allclose(out, ref, atol=1e-3, rtol=1e-3), "mismatch vs reference"

    print("KERNEL_OK")
</pallas_src>

<mosaic_0001>
module attributes {stable_mosaic.version = 11 : i64} {
  func.func @_model_kernel(%arg0: i32, %arg1: memref<1x3x2082xf32, #tpu.memory_space<vmem>>, %arg2: memref<64x27xf32, #tpu.memory_space<vmem>>, %arg3: memref<64x1xf32, #tpu.memory_space<vmem>>, %arg4: memref<1x2048xf32, #tpu.memory_space<vmem>>, %arg5: memref<10x64xf32, #tpu.memory_space<vmem>>, %arg6: memref<10x1xf32, #tpu.memory_space<vmem>>, %arg7: memref<1x10x8xf32, #tpu.memory_space<vmem>>, %arg8: memref<27x2048xf32, #tpu.memory_space<vmem>>) attributes {dimension_semantics = [#tpu.dimension_semantics<parallel>], iteration_bounds = array<i64: 1>, scalar_prefetch = 0 : i64, scratch_operands = 1 : i64, tpu.core_type = #tpu.core_type<tc>, window_params = [{transform_indices = @transform_0, window_bounds = array<i64: 1, 3, 2082>}, {pipeline_mode = #tpu.pipeline_mode<synchronous>, transform_indices = @transform_1, window_bounds = array<i64: 64, 27>}, {pipeline_mode = #tpu.pipeline_mode<synchronous>, transform_indices = @transform_2, window_bounds = array<i64: 64, 1>}, {pipeline_mode = #tpu.pipeline_mode<synchronous>, transform_indices = @transform_3, window_bounds = array<i64: 1, 2048>}, {pipeline_mode = #tpu.pipeline_mode<synchronous>, transform_indices = @transform_4, window_bounds = array<i64: 10, 64>}, {pipeline_mode = #tpu.pipeline_mode<synchronous>, transform_indices = @transform_5, window_bounds = array<i64: 10, 1>}, {transform_indices = @transform_6, window_bounds = array<i64: 1, 10, 8>}]} {
    %c0 = arith.constant 0 : index
    %c0_0 = arith.constant 0 : index
    %c0_1 = arith.constant 0 : index
    %0 = vector.load %arg1[%c0, %c0_0, %c0_1] : memref<1x3x2082xf32, #tpu.memory_space<vmem>>, vector<1x3x2048xf32>
    %1 = vector.shape_cast %0 : vector<1x3x2048xf32> to vector<3x2048xf32>
    %c0_2 = arith.constant 0 : index
    %c0_3 = arith.constant 0 : index
    %2 = vector.load %arg8[%c0_2, %c0_3] : memref<27x2048xf32, #tpu.memory_space<vmem>>, vector<3x2048xf32>
    tpu.vector_store %arg8[%c0_2, %c0_3], %1 {strides = array<i32>} : memref<27x2048xf32, #tpu.memory_space<vmem>>, vector<3x2048xf32>,
    %c0_4 = arith.constant 0 : index
    %c0_5 = arith.constant 0 : index
    %c1 = arith.constant 1 : index
    %3 = vector.load %arg1[%c0_4, %c0_5, %c1] : memref<1x3x2082xf32, #tpu.memory_space<vmem>>, vector<1x3x2048xf32>
    %4 = vector.shape_cast %3 : vector<1x3x2048xf32> to vector<3x2048xf32>
    %c3 = arith.constant 3 : index
    %c0_6 = arith.constant 0 : index
    %5 = vector.load %arg8[%c3, %c0_6] : memref<27x2048xf32, #tpu.memory_space<vmem>>, vector<3x2048xf32>
    tpu.vector_store %arg8[%c3, %c0_6], %4 {strides = array<i32>} : memref<27x2048xf32, #tpu.memory_space<vmem>>, vector<3x2048xf32>,
    %c0_7 = arith.constant 0 : index
    %c0_8 = arith.constant 0 : index
    %c2 = arith.constant 2 : index
    %6 = vector.load %arg1[%c0_7, %c0_8, %c2] : memref<1x3x2082xf32, #tpu.memory_space<vmem>>, vector<1x3x2048xf32>
    %7 = vector.shape_cast %6 : vector<1x3x2048xf32> to vector<3x2048xf32>
    %c6 = arith.constant 6 : index
    %c0_9 = arith.constant 0 : index
    %8 = vector.load %arg8[%c6, %c0_9] : memref<27x2048xf32, #tpu.memory_space<vmem>>, vector<3x2048xf32>
    tpu.vector_store %arg8[%c6, %c0_9], %7 {strides = array<i32>} : memref<27x2048xf32, #tpu.memory_space<vmem>>, vector<3x2048xf32>,
    %c0_10 = arith.constant 0 : index
    %c0_11 = arith.constant 0 : index
    %c16 = arith.constant 16 : index
    %9 = vector.load %arg1[%c0_10, %c0_11, %c16] : memref<1x3x2082xf32, #tpu.memory_space<vmem>>, vector<1x3x2048xf32>
    %10 = vector.shape_cast %9 : vector<1x3x2048xf32> to vector<3x2048xf32>
    %c9 = arith.constant 9 : index
    %c0_12 = arith.constant 0 : index
    %11 = vector.load %arg8[%c9, %c0_12] : memref<27x2048xf32, #tpu.memory_space<vmem>>, vector<3x2048xf32>
    tpu.vector_store %arg8[%c9, %c0_12], %10 {strides = array<i32>} : memref<27x2048xf32, #tpu.memory_space<vmem>>, vector<3x2048xf32>,
    %c0_13 = arith.constant 0 : index
    %c0_14 = arith.constant 0 : index
    %c17 = arith.constant 17 : index
    %12 = vector.load %arg1[%c0_13, %c0_14, %c17] : memref<1x3x2082xf32, #tpu.memory_space<vmem>>, vector<1x3x2048xf32>
    %13 = vector.shape_cast %12 : vector<1x3x2048xf32> to vector<3x2048xf32>
    %c12 = arith.constant 12 : index
    %c0_15 = arith.constant 0 : index
    %14 = vector.load %arg8[%c12, %c0_15] : memref<27x2048xf32, #tpu.memory_space<vmem>>, vector<3x2048xf32>
    tpu.vector_store %arg8[%c12, %c0_15], %13 {strides = array<i32>} : memref<27x2048xf32, #tpu.memory_space<vmem>>, vector<3x2048xf32>,
    %c0_16 = arith.constant 0 : index
    %c0_17 = arith.constant 0 : index
    %c18 = arith.constant 18 : index
    %15 = vector.load %arg1[%c0_16, %c0_17, %c18] : memref<1x3x2082xf32, #tpu.memory_space<vmem>>, vector<1x3x2048xf32>
    %16 = vector.shape_cast %15 : vector<1x3x2048xf32> to vector<3x2048xf32>
    %c15 = arith.constant 15 : index
    %c0_18 = arith.constant 0 : index
    %17 = vector.load %arg8[%c15, %c0_18] : memref<27x2048xf32, #tpu.memory_space<vmem>>, vector<3x2048xf32>
    tpu.vector_store %arg8[%c15, %c0_18], %16 {strides = array<i32>} : memref<27x2048xf32, #tpu.memory_space<vmem>>, vector<3x2048xf32>,
    %c0_19 = arith.constant 0 : index
    %c0_20 = arith.constant 0 : index
    %c32 = arith.constant 32 : index
    %18 = vector.load %arg1[%c0_19, %c0_20, %c32] : memref<1x3x2082xf32, #tpu.memory_space<vmem>>, vector<1x3x2048xf32>
    %19 = vector.shape_cast %18 : vector<1x3x2048xf32> to vector<3x2048xf32>
    %c18_21 = arith.constant 18 : index
    %c0_22 = arith.constant 0 : index
    %20 = vector.load %arg8[%c18_21, %c0_22] : memref<27x2048xf32, #tpu.memory_space<vmem>>, vector<3x2048xf32>
    tpu.vector_store %arg8[%c18_21, %c0_22], %19 {strides = array<i32>} : memref<27x2048xf32, #tpu.memory_space<vmem>>, vector<3x2048xf32>,
    %c0_23 = arith.constant 0 : index
    %c0_24 = arith.constant 0 : index
    %c33 = arith.constant 33 : index
    %21 = vector.load %arg1[%c0_23, %c0_24, %c33] : memref<1x3x2082xf32, #tpu.memory_space<vmem>>, vector<1x3x2048xf32>
    %22 = vector.shape_cast %21 : vector<1x3x2048xf32> to vector<3x2048xf32>
    %c21 = arith.constant 21 : index
    %c0_25 = arith.constant 0 : index
    %23 = vector.load %arg8[%c21, %c0_25] : memref<27x2048xf32, #tpu.memory_space<vmem>>, vector<3x2048xf32>
    tpu.vector_store %arg8[%c21, %c0_25], %22 {strides = array<i32>} : memref<27x2048xf32, #tpu.memory_space<vmem>>, vector<3x2048xf32>,
    %c0_26 = arith.constant 0 : index
    %c0_27 = arith.constant 0 : index
    %c34 = arith.constant 34 : index
    %24 = vector.load %arg1[%c0_26, %c0_27, %c34] : memref<1x3x2082xf32, #tpu.memory_space<vmem>>, vector<1x3x2048xf32>
    %25 = vector.shape_cast %24 : vector<1x3x2048xf32> to vector<3x2048xf32>
    %c24 = arith.constant 24 : index
    %c0_28 = arith.constant 0 : index
    %26 = vector.load %arg8[%c24, %c0_28] : memref<27x2048xf32, #tpu.memory_space<vmem>>, vector<3x2048xf32>
    tpu.vector_store %arg8[%c24, %c0_28], %25 {strides = array<i32>} : memref<27x2048xf32, #tpu.memory_space<vmem>>, vector<3x2048xf32>,
    %c0_29 = arith.constant 0 : index
    %c0_30 = arith.constant 0 : index
    %27 = vector.load %arg2[%c0_29, %c0_30] : memref<64x27xf32, #tpu.memory_space<vmem>>, vector<64x27xf32>
    %c0_31 = arith.constant 0 : index
    %c0_32 = arith.constant 0 : index
    %28 = vector.load %arg8[%c0_31, %c0_32] : memref<27x2048xf32, #tpu.memory_space<vmem>>, vector<27x2048xf32>
    %cst = arith.constant dense<0.000000e+00> : vector<64x2048xf32>
    %29 = tpu.matmul %27, %28, %cst {dimension_numbers = #tpu.dot_dimension_numbers<[1], [0], [0], [1], [0, 0, 1, 1], [], []>} : vector<64x27xf32>, vector<27x2048xf32>, vector<64x2048xf32> -> vector<64x2048xf32>
    %c0_33 = arith.constant 0 : index
    %c0_34 = arith.constant 0 : index
    %30 = vector.load %arg3[%c0_33, %c0_34] : memref<64x1xf32, #tpu.memory_space<vmem>>, vector<64x1xf32>
    %31 = vector.broadcast %30 : vector<64x1xf32> to vector<64x2048xf32>
    %32 = arith.addf %29, %31 : vector<64x2048xf32>
    %cst_35 = arith.constant 0.000000e+00 : f32
    %33 = vector.broadcast %cst_35 : f32 to vector<64x2048xf32>
    %34 = arith.maximumf %32, %33 : vector<64x2048xf32>
    %c0_36 = arith.constant 0 : index
    %c0_37 = arith.constant 0 : index
    %35 = vector.load %arg4[%c0_36, %c0_37] : memref<1x2048xf32, #tpu.memory_space<vmem>>, vector<1x2048xf32>
    %36 = vector.broadcast %35 : vector<1x2048xf32> to vector<64x2048xf32>
    %37 = arith.mulf %34, %36 : vector<64x2048xf32>
    %38 = vector.extract_strided_slice %37 {offsets = [0, 0], sizes = [64, 256], strides = [1, 1]} : vector<64x2048xf32> to vector<64x256xf32>
    %cst_38 = arith.constant dense<0.000000e+00> : vector<64xf32>
    %39 = vector.multi_reduction <add>, %38, %cst_38 [1] : vector<64x256xf32> to vector<64xf32>
    %40 = vector.shape_cast %39 : vector<64xf32> to vector<64x1xf32>
    %41 = vector.extract_strided_slice %37 {offsets = [0, 256], sizes = [64, 256], strides = [1, 1]} : vector<64x2048xf32> to vector<64x256xf32>
    %cst_39 = arith.constant dense<0.000000e+00> : vector<64xf32>
    %42 = vector.multi_reduction <add>, %41, %cst_39 [1] : vector<64x256xf32> to vector<64xf32>
    %43 = vector.shape_cast %42 : vector<64xf32> to vector<64x1xf32>
    %44 = vector.extract_strided_slice %37 {offsets = [0, 512], sizes = [64, 256], strides = [1, 1]} : vector<64x2048xf32> to vector<64x256xf32>
    %cst_40 = arith.constant dense<0.000000e+00> : vector<64xf32>
    %45 = vector.multi_reduction <add>, %44, %cst_40 [1] : vector<64x256xf32> to vector<64xf32>
    %46 = vector.shape_cast %45 : vector<64xf32> to vector<64x1xf32>
    %47 = vector.extract_strided_slice %37 {offsets = [0, 768], sizes = [64, 256], strides = [1, 1]} : vector<64x2048xf32> to vector<64x256xf32>
    %cst_41 = arith.constant dense<0.000000e+00> : vector<64xf32>
    %48 = vector.multi_reduction <add>, %47, %cst_41 [1] : vector<64x256xf32> to vector<64xf32>
    %49 = vector.shape_cast %48 : vector<64xf32> to vector<64x1xf32>
    %50 = vector.extract_strided_slice %37 {offsets = [0, 1024], sizes = [64, 256], strides = [1, 1]} : vector<64x2048xf32> to vector<64x256xf32>
    %cst_42 = arith.constant dense<0.000000e+00> : vector<64xf32>
    %51 = vector.multi_reduction <add>, %50, %cst_42 [1] : vector<64x256xf32> to vector<64xf32>
    %52 = vector.shape_cast %51 : vector<64xf32> to vector<64x1xf32>
    %53 = vector.extract_strided_slice %37 {offsets = [0, 1280], sizes = [64, 256], strides = [1, 1]} : vector<64x2048xf32> to vector<64x256xf32>
    %cst_43 = arith.constant dense<0.000000e+00> : vector<64xf32>
    %54 = vector.multi_reduction <add>, %53, %cst_43 [1] : vector<64x256xf32> to vector<64xf32>
    %55 = vector.shape_cast %54 : vector<64xf32> to vector<64x1xf32>
    %56 = vector.extract_strided_slice %37 {offsets = [0, 1536], sizes = [64, 256], strides = [1, 1]} : vector<64x2048xf32> to vector<64x256xf32>
    %cst_44 = arith.constant dense<0.000000e+00> : vector<64xf32>
    %57 = vector.multi_reduction <add>, %56, %cst_44 [1] : vector<64x256xf32> to vector<64xf32>
    %58 = vector.shape_cast %57 : vector<64xf32> to vector<64x1xf32>
    %59 = vector.extract_strided_slice %37 {offsets = [0, 1792], sizes = [64, 256], strides = [1, 1]} : vector<64x2048xf32> to vector<64x256xf32>
    %cst_45 = arith.constant dense<0.000000e+00> : vector<64xf32>
    %60 = vector.multi_reduction <add>, %59, %cst_45 [1] : vector<64x256xf32> to vector<64xf32>
    %61 = vector.shape_cast %60 : vector<64xf32> to vector<64x1xf32>
    %62 = tpu.concatenate %40, %43, %46, %49, %52, %55, %58, %61 in 1 : vector<64x1xf32>, vector<64x1xf32>, vector<64x1xf32>, vector<64x1xf32>, vector<64x1xf32>, vector<64x1xf32>, vector<64x1xf32>, vector<64x1xf32> -> vector<64x8xf32>
    %c0_46 = arith.constant 0 : index
    %c0_47 = arith.constant 0 : index
    %63 = vector.load %arg5[%c0_46, %c0_47] : memref<10x64xf32, #tpu.memory_space<vmem>>, vector<10x64xf32>
    %cst_48 = arith.constant dense<0.000000e+00> : vector<10x8xf32>
    %64 = tpu.matmul %63, %62, %cst_48 {dimension_numbers = #tpu.dot_dimension_numbers<[1], [0], [0], [1], [0, 0, 1, 1], [], []>} : vector<10x64xf32>, vector<64x8xf32>, vector<10x8xf32> -> vector<10x8xf32>
    %c0_49 = arith.constant 0 : index
    %c0_50 = arith.constant 0 : index
    %65 = vector.load %arg6[%c0_49, %c0_50] : memref<10x1xf32, #tpu.memory_space<vmem>>, vector<10x1xf32>
    %66 = vector.broadcast %65 : vector<10x1xf32> to vector<10x8xf32>
    %67 = arith.addf %64, %66 : vector<10x8xf32>
    %c0_51 = arith.constant 0 : index
    %c0_52 = arith.constant 0 : index
    %c0_53 = arith.constant 0 : index
    %68 = vector.load %arg7[%c0_51, %c0_52, %c0_53] : memref<1x10x8xf32, #tpu.memory_space<vmem>>, vector<1x10x8xf32>
    %69 = vector.shape_cast %68 : vector<1x10x8xf32> to vector<10x8xf32>
    %70 = vector.shape_cast %67 : vector<10x8xf32> to vector<1x10x8xf32>
    tpu.vector_store %arg7[%c0_51, %c0_52, %c0_53], %70 {strides = array<i32>} : memref<1x10x8xf32, #tpu.memory_space<vmem>>, vector<1x10x8xf32>,
    return
  }
  func.func @transform_0(%arg0: i32) -> (i32, i32, i32) {
    %c0_i32 = arith.constant 0 : i32
    %c0_i32_0 = arith.constant 0 : i32
    %c0_i32_1 = arith.constant 0 : i32
    return %arg0, %c0_i32, %c0_i32_0 : i32, i32, i32
  }
  func.func @transform_1(%arg0: i32) -> (i32, i32) {
    %c0_i32 = arith.constant 0 : i32
    %c0_i32_0 = arith.constant 0 : i32
    %c0_i32_1 = arith.constant 0 : i32
    return %c0_i32, %c0_i32_0 : i32, i32
  }
  func.func @transform_2(%arg0: i32) -> (i32, i32) {
    %c0_i32 = arith.constant 0 : i32
    %c0_i32_0 = arith.constant 0 : i32
    %c0_i32_1 = arith.constant 0 : i32
    return %c0_i32, %c0_i32_0 : i32, i32
  }
  func.func @transform_3(%arg0: i32) -> (i32, i32) {
    %c0_i32 = arith.constant 0 : i32
    %c0_i32_0 = arith.constant 0 : i32
    %c0_i32_1 = arith.constant 0 : i32
    return %c0_i32, %c0_i32_0 : i32, i32
  }
  func.func @transform_4(%arg0: i32) -> (i32, i32) {
    %c0_i32 = arith.constant 0 : i32
    %c0_i32_0 = arith.constant 0 : i32
    %c0_i32_1 = arith.constant 0 : i32
    return %c0_i32, %c0_i32_0 : i32, i32
  }
  func.func @transform_5(%arg0: i32) -> (i32, i32) {
    %c0_i32 = arith.constant 0 : i32
    %c0_i32_0 = arith.constant 0 : i32
    %c0_i32_1 = arith.constant 0 : i32
    return %c0_i32, %c0_i32_0 : i32, i32
  }
  func.func @transform_6(%arg0: i32) -> (i32, i32, i32) {
    %c0_i32 = arith.constant 0 : i32
    %c0_i32_0 = arith.constant 0 : i32
    %c0_i32_1 = arith.constant 0 : i32
    return %arg0, %c0_i32, %c0_i32_0 : i32, i32, i32
  }
}

</mosaic_0001>

<llo_original>
// kernel: model_forward.1
$region0: #{model_forward.1}
  #allocation0 [shape = 'u32[]', space=smem, size = 0x4, offset = 0x4, fixed_abs, tag = 'smem constant byte address 0x4 - core index']
  #allocation1 [shape = 'u32[144,128]{1,0:T(1,128)}', space=vmem, size = 0x12000, scoped, tag = 'internal scratch']
  #allocation2 [shape = 'f32[27,2048]{1,0:T(8,128)}', space=vmem, size = 0x40000, scoped, tag = 'scratch operand']
  %s0 = inlined_call_operand.vmem [shape: f32[1,3,2082], index: 0, kind: input, shape index: {}]
  %s1 = inlined_call_operand.vmem [shape: f32[64,27], index: 1, kind: input, shape index: {}]
  %s2 = inlined_call_operand.vmem [shape: f32[64,1], index: 2, kind: input, shape index: {}]
  %s3 = inlined_call_operand.vmem [shape: f32[1,2048], index: 3, kind: input, shape index: {}]
  %s4 = inlined_call_operand.vmem [shape: f32[10,64], index: 4, kind: input, shape index: {}]
  %s5 = inlined_call_operand.vmem [shape: f32[10,1], index: 5, kind: input, shape index: {}]
  %s6 = inlined_call_operand.vmem [shape: f32[1,10,8], index: 6, kind: output, shape index: {}]
  %s7 = sld [smem:[#allocation0]]
  $region34: #{model_forward.1} parent=0
    _
  %s9 = ssub.s32 1, %s7
  %s10 = scalar_select 0, %s9, %s7
  // Predicated region
  $region2: #{model_forward.1} parent=0 // pred_check
    _
  $region3: #{model_forward.1} parent=0 // pred_check_branch
    %12 = sbr.rel (0) target = $region5
  $region4: #{model_forward.1} parent=0 // pred_region
    _
  $region5: #{model_forward.1} parent=0 // pred_fallthru
    _
  // Predicated region
  $region6: #{model_forward.1} parent=0 // pred_check
    _
  $region7: #{model_forward.1} parent=0 // pred_check_branch
    %14 = sbr.rel (0) target = $region9
  $region8: #{model_forward.1} parent=0 // pred_region
    _
  $region9: #{model_forward.1} parent=0 // pred_fallthru
    _
  // Predicated region
  $region10: #{model_forward.1} parent=0 // pred_check
    _
  $region11: #{model_forward.1} parent=0 // pred_check_branch
    %16 = sbr.rel (0) target = $region13
  $region12: #{model_forward.1} parent=0 // pred_region
    _
  $region13: #{model_forward.1} parent=0 // pred_fallthru
    _
  // Predicated region
  $region14: #{model_forward.1} parent=0 // pred_check
    _
  $region15: #{model_forward.1} parent=0 // pred_check_branch
    %18 = sbr.rel (0) target = $region17
  $region16: #{model_forward.1} parent=0 // pred_region
    _
  $region17: #{model_forward.1} parent=0 // pred_fallthru
    _
  // Predicated region
  $region18: #{model_forward.1} parent=0 // pred_check
    _
  $region19: #{model_forward.1} parent=0 // pred_check_branch
    %20 = sbr.rel (0) target = $region21
  $region20: #{model_forward.1} parent=0 // pred_region
    _
  $region21: #{model_forward.1} parent=0 // pred_fallthru
    _
  // Predicated region
  $region22: #{model_forward.1} parent=0 // pred_check
    _
  $region23: #{model_forward.1} parent=0 // pred_check_branch
    %22 = sbr.rel (0) target = $region25
  $region24: #{model_forward.1} parent=0 // pred_region
    _
  $region25: #{model_forward.1} parent=0 // pred_fallthru
    _
  %v23 = vld [vmem:[%s0] sm:$0x77]
  %v24 = vld [vmem:[%s0 + $0x8] sm:$0x77]
  %v25 = vld [vmem:[%s0 + $0x10] sm:$0x77]
  %v26 = vld [vmem:[%s0 + $0x18] sm:$0x77]
  %v27 = vld [vmem:[%s0 + $0x20] sm:$0x77]
  %v28 = vld [vmem:[%s0 + $0x28] sm:$0x77]
  %v29 = vld [vmem:[%s0 + $0x30] sm:$0x77]
  %v30 = vld [vmem:[%s0 + $0x38] sm:$0x77]
  %v39 = vcombine.high %v23, %v23
  %v40 = vcombine.high %v24, %v24
  %v41 = vcombine.high %v25, %v25
  %v42 = vcombine.high %v26, %v26
  %v43 = vcombine.high %v27, %v27
  %v44 = vcombine.high %v28, %v28
  %v45 = vcombine.high %v29, %v29
  %v46 = vcombine.high %v30, %v30
  %55 = vst [vmem:[#allocation2] sm:$0x7] %v23
  %56 = vst [vmem:[#allocation2 + $0x8] sm:$0x7] %v39
  %57 = vst [vmem:[#allocation2 + $0x10] sm:$0x7] %v24
  %58 = vst [vmem:[#allocation2 + $0x18] sm:$0x7] %v40
  %59 = vst [vmem:[#allocation2 + $0x20] sm:$0x7] %v25
  %60 = vst [vmem:[#allocation2 + $0x28] sm:$0x7] %v41
  %61 = vst [vmem:[#allocation2 + $0x30] sm:$0x7] %v26
  %62 = vst [vmem:[#allocation2 + $0x38] sm:$0x7] %v42
  %63 = vst [vmem:[#allocation2 + $0x40] sm:$0x7] %v27
  %64 = vst [vmem:[#allocation2 + $0x48] sm:$0x7] %v43
  %65 = vst [vmem:[#allocation2 + $0x50] sm:$0x7] %v28
  %66 = vst [vmem:[#allocation2 + $0x58] sm:$0x7] %v44
  %67 = vst [vmem:[#allocation2 + $0x60] sm:$0x7] %v29
  %68 = vst [vmem:[#allocation2 + $0x68] sm:$0x7] %v45
  %69 = vst [vmem:[#allocation2 + $0x70] sm:$0x7] %v30
  %70 = vst [vmem:[#allocation2 + $0x78] sm:$0x7] %v46
  %v71 = vld [vmem:[%s0] sm:$0x77]
  %v72 = vld [vmem:[%s0 + $0x8] sm:$0x77]
  %v73 = vld [vmem:[%s0 + $0x10] sm:$0x77]
  %v74 = vld [vmem:[%s0 + $0x18] sm:$0x77]
  %v75 = vld [vmem:[%s0 + $0x20] sm:$0x77]
  %v76 = vld [vmem:[%s0 + $0x28] sm:$0x77]
  %v77 = vld [vmem:[%s0 + $0x30] sm:$0x77]
  %v78 = vld [vmem:[%s0 + $0x38] sm:$0x77]
  %v79 = vld [vmem:[%s0 + $0x40] sm:$0x7]
  %v89 = vcombine.high %v71, %v71
  %v90 = vcombine.high %v72, %v72
  %v91 = vcombine.high %v73, %v73
  %v92 = vcombine.high %v74, %v74
  %v93 = vcombine.high %v75, %v75
  %v94 = vcombine.high %v76, %v76
  %v95 = vcombine.high %v77, %v77
  %v96 = vcombine.high %v78, %v78
  %v97 = vrot.slane %v71, 5
  %v98 = vrot.slane %v89, 5
  %v99 = vrot.slane %v72, 5
  %v100 = vrot.slane %v90, 5
  %v101 = vrot.slane %v73, 5
  %v102 = vrot.slane %v91, 5
  %v103 = vrot.slane %v74, 5
  %v104 = vrot.slane %v92, 5
  %v105 = vrot.slane %v75, 5
  %v106 = vrot.slane %v93, 5
  %v107 = vrot.slane %v76, 5
  %v108 = vrot.slane %v94, 5
  %v109 = vrot.slane %v77, 5
  %v110 = vrot.slane %v95, 5
  %v111 = vrot.slane %v78, 5
  %v112 = vrot.slane %v96, 5
  %v113 = vrot.slane %v79, 5
  %114 = vrot.lane.b32.xlu0 %v97, 127
  %v115 = vpop.permute.xlu0 %114
  %116 = vrot.lane.b32.xlu0 %v98, 127
  %v117 = vpop.permute.xlu0 %116
  %118 = vrot.lane.b32.xlu0 %v99, 127
  %v119 = vpop.permute.xlu0 %118
  %120 = vrot.lane.b32.xlu0 %v100, 127
  %v121 = vpop.permute.xlu0 %120
  %122 = vrot.lane.b32.xlu0 %v101, 127
  %v123 = vpop.permute.xlu0 %122
  %124 = vrot.lane.b32.xlu0 %v102, 127
  %v125 = vpop.permute.xlu0 %124
  %126 = vrot.lane.b32.xlu0 %v103, 127
  %v127 = vpop.permute.xlu0 %126
  %128 = vrot.lane.b32.xlu0 %v104, 127
  %v129 = vpop.permute.xlu0 %128
  %130 = vrot.lane.b32.xlu0 %v105, 127
  %v131 = vpop.permute.xlu0 %130
  %132 = vrot.lane.b32.xlu0 %v106, 127
  %v133 = vpop.permute.xlu0 %132
  %134 = vrot.lane.b32.xlu0 %v107, 127
  %v135 = vpop.permute.xlu0 %134
  %136 = vrot.lane.b32.xlu0 %v108, 127
  %v137 = vpop.permute.xlu0 %136
  %138 = vrot.lane.b32.xlu0 %v109, 127
  %v139 = vpop.permute.xlu0 %138
  %140 = vrot.lane.b32.xlu0 %v110, 127
  %v141 = vpop.permute.xlu0 %140
  %142 = vrot.lane.b32.xlu0 %v111, 127
  %v143 = vpop.permute.xlu0 %142
  %144 = vrot.lane.b32.xlu0 %v112, 127
  %v145 = vpop.permute.xlu0 %144
  %146 = vrot.lane.b32.xlu0 %v113, 127
  %v147 = vpop.permute.xlu0 %146
  %vm148 = vcmask 1039360
  %v149 = vsel %vm148, %v115, %v117
  %v150 = vsel %vm148, %v117, %v119
  %v151 = vsel %vm148, %v119, %v121
  %v152 = vsel %vm148, %v121, %v123
  %v153 = vsel %vm148, %v123, %v125
  %v154 = vsel %vm148, %v125, %v127
  %v155 = vsel %vm148, %v127, %v129
  %v156 = vsel %vm148, %v129, %v131
  %v157 = vsel %vm148, %v131, %v133
  %v158 = vsel %vm148, %v133, %v135
  %v159 = vsel %vm148, %v135, %v137
  %v160 = vsel %vm148, %v137, %v139
  %v161 = vsel %vm148, %v139, %v141
  %v162 = vsel %vm148, %v141, %v143
  %v163 = vsel %vm148, %v143, %v145
  %v164 = vsel %vm148, %v145, %v147
  %181 = vst [vmem:[#allocation2] sm:$0x38] %v149
  %182 = vst [vmem:[#allocation2 + $0x8] sm:$0x38] %v150
  %183 = vst [vmem:[#allocation2 + $0x10] sm:$0x38] %v151
  %184 = vst [vmem:[#allocation2 + $0x18] sm:$0x38] %v152
  %185 = vst [vmem:[#allocation2 + $0x20] sm:$0x38] %v153
  %186 = vst [vmem:[#allocation2 + $0x28] sm:$0x38] %v154
  %187 = vst [vmem:[#allocation2 + $0x30] sm:$0x38] %v155
  %188 = vst [vmem:[#allocation2 + $0x38] sm:$0x38] %v156
  %189 = vst [vmem:[#allocation2 + $0x40] sm:$0x38] %v157
  %190 = vst [vmem:[#allocation2 + $0x48] sm:$0x38] %v158
  %191 = vst [vmem:[#allocation2 + $0x50] sm:$0x38] %v159
  %192 = vst [vmem:[#allocation2 + $0x58] sm:$0x38] %v160
  %193 = vst [vmem:[#allocation2 + $0x60] sm:$0x38] %v161
  %194 = vst [vmem:[#allocation2 + $0x68] sm:$0x38] %v162
  %195 = vst [vmem:[#allocation2 + $0x70] sm:$0x38] %v163
  %196 = vst [vmem:[#allocation2 + $0x78] sm:$0x38] %v164
  %v197 = vld [vmem:[%s0] sm:$0x77]
  %v198 = vld [vmem:[%s0 + $0x8] sm:$0x77]
  %v199 = vld [vmem:[%s0 + $0x10] sm:$0x77]
  %v200 = vld [vmem:[%s0 + $0x18] sm:$0x77]
  %v201 = vld [vmem:[%s0 + $0x20] sm:$0x77]
  %v202 = vld [vmem:[%s0 + $0x28] sm:$0x77]
  %v203 = vld [vmem:[%s0 + $0x30] sm:$0x77]
  %v204 = vld [vmem:[%s0 + $0x38] sm:$0x77]
  %v205 = vld [vmem:[%s0 + $0x40] sm:$0x7]
  %v215 = vcombine.high %v197, %v197
  %v216 = vcombine.high %v198, %v198
  %v217 = vcombine.high %v199, %v199
  %v218 = vcombine.high %v200, %v200
  %v219 = vcombine.high %v201, %v201
  %v220 = vcombine.high %v202, %v202
  %v221 = vcombine.high %v203, %v203
  %v222 = vcombine.high %v204, %v204
  %v223 = vrot.slane %v197, 2
  %v224 = vrot.slane %v215, 2
  %v225 = vrot.slane %v198, 2
  %v226 = vrot.slane %v216, 2
  %v227 = vrot.slane %v199, 2
  %v228 = vrot.slane %v217, 2
  %v229 = vrot.slane %v200, 2
  %v230 = vrot.slane %v218, 2
  %v231 = vrot.slane %v201, 2
  %v232 = vrot.slane %v219, 2
  %v233 = vrot.slane %v202, 2
  %v234 = vrot.slane %v220, 2
  %v235 = vrot.slane %v203, 2
  %v236 = vrot.slane %v221, 2
  %v237 = vrot.slane %v204, 2
  %v238 = vrot.slane %v222, 2
  %v239 = vrot.slane %v205, 2
  %240 = vrot.lane.b32.xlu0 %v223, 126
  %v241 = vpop.permute.xlu0 %240
  %242 = vrot.lane.b32.xlu0 %v224, 126
  %v243 = vpop.permute.xlu0 %242
  %244 = vrot.lane.b32.xlu0 %v225, 126
  %v245 = vpop.permute.xlu0 %244
  %246 = vrot.lane.b32.xlu0 %v226, 126
  %v247 = vpop.permute.xlu0 %246
  %248 = vrot.lane.b32.xlu0 %v227, 126
  %v249 = vpop.permute.xlu0 %248
  %250 = vrot.lane.b32.xlu0 %v228, 126
  %v251 = vpop.permute.xlu0 %250
  %252 = vrot.lane.b32.xlu0 %v229, 126
  %v253 = vpop.permute.xlu0 %252
  %254 = vrot.lane.b32.xlu0 %v230, 126
  %v255 = vpop.permute.xlu0 %254
  %256 = vrot.lane.b32.xlu0 %v231, 126
  %v257 = vpop.permute.xlu0 %256
  %258 = vrot.lane.b32.xlu0 %v232, 126
  %v259 = vpop.permute.xlu0 %258
  %260 = vrot.lane.b32.xlu0 %v233, 126
  %v261 = vpop.permute.xlu0 %260
  %262 = vrot.lane.b32.xlu0 %v234, 126
  %v263 = vpop.permute.xlu0 %262
  %264 = vrot.lane.b32.xlu0 %v235, 126
  %v265 = vpop.permute.xlu0 %264
  %266 = vrot.lane.b32.xlu0 %v236, 126
  %v267 = vpop.permute.xlu0 %266
  %268 = vrot.lane.b32.xlu0 %v237, 126
  %v269 = vpop.permute.xlu0 %268
  %270 = vrot.lane.b32.xlu0 %v238, 126
  %v271 = vpop.permute.xlu0 %270
  %272 = vrot.lane.b32.xlu0 %v239, 126
  %v273 = vpop.permute.xlu0 %272
  %vm274 = vcmask 1031168
  %v275 = vsel %vm274, %v241, %v243
  %v276 = vsel %vm274, %v243, %v245
  %v277 = vsel %vm274, %v245, %v247
  %v278 = vsel %vm274, %v247, %v249
  %v279 = vsel %vm274, %v249, %v251
  %v280 = vsel %vm274, %v251, %v253
  %v281 = vsel %vm274, %v253, %v255
  %v282 = vsel %vm274, %v255, %v257
  %v283 = vsel %vm274, %v257, %v259
  %v284 = vsel %vm274, %v259, %v261
  %v285 = vsel %vm274, %v261, %v263
  %v286 = vsel %vm274, %v263, %v265
  %v287 = vsel %vm274, %v265, %v267
  %v288 = vsel %vm274, %v267, %v269
  %v289 = vsel %vm274, %v269, %v271
  %v290 = vsel %vm274, %v271, %v273
  %307 = vst [vmem:[#allocation2] sm:$0xc0] %v275
  %308 = vst [vmem:[#allocation2 + $0x8] sm:$0xc0] %v276
  %309 = vst [vmem:[#allocation2 + $0x10] sm:$0xc0] %v277
  %310 = vst [vmem:[#allocation2 + $0x18] sm:$0xc0] %v278
  %311 = vst [vmem:[#allocation2 + $0x20] sm:$0xc0] %v279
  %312 = vst [vmem:[#allocation2 + $0x28] sm:$0xc0] %v280
  %313 = vst [vmem:[#allocation2 + $0x30] sm:$0xc0] %v281
  %314 = vst [vmem:[#allocation2 + $0x38] sm:$0xc0] %v282
  %315 = vst [vmem:[#allocation2 + $0x40] sm:$0xc0] %v283
  %316 = vst [vmem:[#allocation2 + $0x48] sm:$0xc0] %v284
  %317 = vst [vmem:[#allocation2 + $0x50] sm:$0xc0] %v285
  %318 = vst [vmem:[#allocation2 + $0x58] sm:$0xc0] %v286
  %319 = vst [vmem:[#allocation2 + $0x60] sm:$0xc0] %v287
  %320 = vst [vmem:[#allocation2 + $0x68] sm:$0xc0] %v288
  %321 = vst [vmem:[#allocation2 + $0x70] sm:$0xc0] %v289
  %322 = vst [vmem:[#allocation2 + $0x78] sm:$0xc0] %v290
  %323 = vst [vmem:[#allocation2 + $0x80] sm:$0x1] %v275
  %324 = vst [vmem:[#allocation2 + $0x88] sm:$0x1] %v276
  %325 = vst [vmem:[#allocation2 + $0x90] sm:$0x1] %v277
  %326 = vst [vmem:[#allocation2 + $0x98] sm:$0x1] %v278
  %327 = vst [vmem:[#allocation2 + $0xa0] sm:$0x1] %v279
  %328 = vst [vmem:[#allocation2 + $0xa8] sm:$0x1] %v280
  %329 = vst [vmem:[#allocation2 + $0xb0] sm:$0x1] %v281
  %330 = vst [vmem:[#allocation2 + $0xb8] sm:$0x1] %v282
  %331 = vst [vmem:[#allocation2 + $0xc0] sm:$0x1] %v283
  %332 = vst [vmem:[#allocation2 + $0xc8] sm:$0x1] %v284
  %333 = vst [vmem:[#allocation2 + $0xd0] sm:$0x1] %v285
  %334 = vst [vmem:[#allocation2 + $0xd8] sm:$0x1] %v286
  %335 = vst [vmem:[#allocation2 + $0xe0] sm:$0x1] %v287
  %336 = vst [vmem:[#allocation2 + $0xe8] sm:$0x1] %v288
  %337 = vst [vmem:[#allocation2 + $0xf0] sm:$0x1] %v289
  %338 = vst [vmem:[#allocation2 + $0xf8] sm:$0x1] %v290
  %v339 = vld [vmem:[%s0] sm:$0x77]
  %v340 = vld [vmem:[%s0 + $0x8] sm:$0x77]
  %v341 = vld [vmem:[%s0 + $0x10] sm:$0x77]
  %v342 = vld [vmem:[%s0 + $0x18] sm:$0x77]
  %v343 = vld [vmem:[%s0 + $0x20] sm:$0x77]
  %v344 = vld [vmem:[%s0 + $0x28] sm:$0x77]
  %v345 = vld [vmem:[%s0 + $0x30] sm:$0x77]
  %v346 = vld [vmem:[%s0 + $0x38] sm:$0x77]
  %v347 = vld [vmem:[%s0 + $0x40] sm:$0x7]
  %v357 = vcombine.high %v339, %v339
  %v358 = vcombine.high %v340, %v340
  %v359 = vcombine.high %v341, %v341
  %v360 = vcombine.high %v342, %v342
  %v361 = vcombine.high %v343, %v343
  %v362 = vcombine.high %v344, %v344
  %v363 = vcombine.high %v345, %v345
  %v364 = vcombine.high %v346, %v346
  %v365 = vrot.slane %v339, 7
  %v366 = vrot.slane %v357, 7
  %v367 = vrot.slane %v340, 7
  %v368 = vrot.slane %v358, 7
  %v369 = vrot.slane %v341, 7
  %v370 = vrot.slane %v359, 7
  %v371 = vrot.slane %v342, 7
  %v372 = vrot.slane %v360, 7
  %v373 = vrot.slane %v343, 7
  %v374 = vrot.slane %v361, 7
  %v375 = vrot.slane %v344, 7
  %v376 = vrot.slane %v362, 7
  %v377 = vrot.slane %v345, 7
  %v378 = vrot.slane %v363, 7
  %v379 = vrot.slane %v346, 7
  %v380 = vrot.slane %v364, 7
  %v381 = vrot.slane %v347, 7
  %382 = vrot.lane.b32.xlu0 %v365, 112
  %v383 = vpop.permute.xlu0 %382
  %384 = vrot.lane.b32.xlu0 %v366, 112
  %v385 = vpop.permute.xlu0 %384
  %386 = vrot.lane.b32.xlu0 %v367, 112
  %v387 = vpop.permute.xlu0 %386
  %388 = vrot.lane.b32.xlu0 %v368, 112
  %v389 = vpop.permute.xlu0 %388
  %390 = vrot.lane.b32.xlu0 %v369, 112
  %v391 = vpop.permute.xlu0 %390
  %392 = vrot.lane.b32.xlu0 %v370, 112
  %v393 = vpop.permute.xlu0 %392
  %394 = vrot.lane.b32.xlu0 %v371, 112
  %v395 = vpop.permute.xlu0 %394
  %396 = vrot.lane.b32.xlu0 %v372, 112
  %v397 = vpop.permute.xlu0 %396
  %398 = vrot.lane.b32.xlu0 %v373, 112
  %v399 = vpop.permute.xlu0 %398
  %400 = vrot.lane.b32.xlu0 %v374, 112
  %v401 = vpop.permute.xlu0 %400
  %402 = vrot.lane.b32.xlu0 %v375, 112
  %v403 = vpop.permute.xlu0 %402
  %404 = vrot.lane.b32.xlu0 %v376, 112
  %v405 = vpop.permute.xlu0 %404
  %406 = vrot.lane.b32.xlu0 %v377, 112
  %v407 = vpop.permute.xlu0 %406
  %408 = vrot.lane.b32.xlu0 %v378, 112
  %v409 = vpop.permute.xlu0 %408
  %410 = vrot.lane.b32.xlu0 %v379, 112
  %v411 = vpop.permute.xlu0 %410
  %412 = vrot.lane.b32.xlu0 %v380, 112
  %v413 = vpop.permute.xlu0 %412
  %414 = vrot.lane.b32.xlu0 %v381, 112
  %v415 = vpop.permute.xlu0 %414
  %vm416 = vcmask 916480
  %v417 = vsel %vm416, %v383, %v385
  %v418 = vsel %vm416, %v385, %v387
  %v419 = vsel %vm416, %v387, %v389
  %v420 = vsel %vm416, %v389, %v391
  %v421 = vsel %vm416, %v391, %v393
  %v422 = vsel %vm416, %v393, %v395
  %v423 = vsel %vm416, %v395, %v397
  %v424 = vsel %vm416, %v397, %v399
  %v425 = vsel %vm416, %v399, %v401
  %v426 = vsel %vm416, %v401, %v403
  %v427 = vsel %vm416, %v403, %v405
  %v428 = vsel %vm416, %v405, %v407
  %v429 = vsel %vm416, %v407, %v409
  %v430 = vsel %vm416, %v409, %v411
  %v431 = vsel %vm416, %v411, %v413
  %v432 = vsel %vm416, %v413, %v415
  %449 = vst [vmem:[#allocation2 + $0x80] sm:$0xe] %v417
  %450 = vst [vmem:[#allocation2 + $0x88] sm:$0xe] %v418
  %451 = vst [vmem:[#allocation2 + $0x90] sm:$0xe] %v419
  %452 = vst [vmem:[#allocation2 + $0x98] sm:$0xe] %v420
  %453 = vst [vmem:[#allocation2 + $0xa0] sm:$0xe] %v421
  %454 = vst [vmem:[#allocation2 + $0xa8] sm:$0xe] %v422
  %455 = vst [vmem:[#allocation2 + $0xb0] sm:$0xe] %v423
  %456 = vst [vmem:[#allocation2 + $0xb8] sm:$0xe] %v424
  %457 = vst [vmem:[#allocation2 + $0xc0] sm:$0xe] %v425
  %458 = vst [vmem:[#allocation2 + $0xc8] sm:$0xe] %v426
  %459 = vst [vmem:[#allocation2 + $0xd0] sm:$0xe] %v427
  %460 = vst [vmem:[#allocation2 + $0xd8] sm:$0xe] %v428
  %461 = vst [vmem:[#allocation2 + $0xe0] sm:$0xe] %v429
  %462 = vst [vmem:[#allocation2 + $0xe8] sm:$0xe] %v430
  %463 = vst [vmem:[#allocation2 + $0xf0] sm:$0xe] %v431
  %464 = vst [vmem:[#allocation2 + $0xf8] sm:$0xe] %v432
  %v465 = vld [vmem:[%s0] sm:$0x77]
  %v466 = vld [vmem:[%s0 + $0x8] sm:$0x77]
  %v467 = vld [vmem:[%s0 + $0x10] sm:$0x77]
  %v468 = vld [vmem:[%s0 + $0x18] sm:$0x77]
  %v469 = vld [vmem:[%s0 + $0x20] sm:$0x77]
  %v470 = vld [vmem:[%s0 + $0x28] sm:$0x77]
  %v471 = vld [vmem:[%s0 + $0x30] sm:$0x77]
  %v472 = vld [vmem:[%s0 + $0x38] sm:$0x77]
  %v473 = vld [vmem:[%s0 + $0x40] sm:$0x7]
  %v483 = vcombine.low %v465, %v465
  %v484 = vcombine.low %v466, %v466
  %v485 = vcombine.low %v467, %v467
  %v486 = vcombine.low %v468, %v468
  %v487 = vcombine.low %v469, %v469
  %v488 = vcombine.low %v470, %v470
  %v489 = vcombine.low %v471, %v471
  %v490 = vcombine.low %v472, %v472
  %v491 = vcombine.low %v473, %v473
  %492 = vrot.lane.b32.xlu0 %v483, 111
  %v493 = vpop.permute.xlu0 %492
  %494 = vrot.lane.b32.xlu0 %v465, 111
  %v495 = vpop.permute.xlu0 %494
  %496 = vrot.lane.b32.xlu0 %v484, 111
  %v497 = vpop.permute.xlu0 %496
  %498 = vrot.lane.b32.xlu0 %v466, 111
  %v499 = vpop.permute.xlu0 %498
  %500 = vrot.lane.b32.xlu0 %v485, 111
  %v501 = vpop.permute.xlu0 %500
  %502 = vrot.lane.b32.xlu0 %v467, 111
  %v503 = vpop.permute.xlu0 %502
  %504 = vrot.lane.b32.xlu0 %v486, 111
  %v505 = vpop.permute.xlu0 %504
  %506 = vrot.lane.b32.xlu0 %v468, 111
  %v507 = vpop.permute.xlu0 %506
  %508 = vrot.lane.b32.xlu0 %v487, 111
  %v509 = vpop.permute.xlu0 %508
  %510 = vrot.lane.b32.xlu0 %v469, 111
  %v511 = vpop.permute.xlu0 %510
  %512 = vrot.lane.b32.xlu0 %v488, 111
  %v513 = vpop.permute.xlu0 %512
  %514 = vrot.lane.b32.xlu0 %v470, 111
  %v515 = vpop.permute.xlu0 %514
  %516 = vrot.lane.b32.xlu0 %v489, 111
  %v517 = vpop.permute.xlu0 %516
  %518 = vrot.lane.b32.xlu0 %v471, 111
  %v519 = vpop.permute.xlu0 %518
  %520 = vrot.lane.b32.xlu0 %v490, 111
  %v521 = vpop.permute.xlu0 %520
  %522 = vrot.lane.b32.xlu0 %v472, 111
  %v523 = vpop.permute.xlu0 %522
  %524 = vrot.lane.b32.xlu0 %v491, 111
  %v525 = vpop.permute.xlu0 %524
  %vm526 = vcmask 908288
  %v527 = vsel %vm526, %v493, %v495
  %v528 = vsel %vm526, %v495, %v497
  %v529 = vsel %vm526, %v497, %v499
  %v530 = vsel %vm526, %v499, %v501
  %v531 = vsel %vm526, %v501, %v503
  %v532 = vsel %vm526, %v503, %v505
  %v533 = vsel %vm526, %v505, %v507
  %v534 = vsel %vm526, %v507, %v509
  %v535 = vsel %vm526, %v509, %v511
  %v536 = vsel %vm526, %v511, %v513
  %v537 = vsel %vm526, %v513, %v515
  %v538 = vsel %vm526, %v515, %v517
  %v539 = vsel %vm526, %v517, %v519
  %v540 = vsel %vm526, %v519, %v521
  %v541 = vsel %vm526, %v521, %v523
  %v542 = vsel %vm526, %v523, %v525
  %559 = vst [vmem:[#allocation2 + $0x80] sm:$0x70] %v527
  %560 = vst [vmem:[#allocation2 + $0x88] sm:$0x70] %v528
  %561 = vst [vmem:[#allocation2 + $0x90] sm:$0x70] %v529
  %562 = vst [vmem:[#allocation2 + $0x98] sm:$0x70] %v530
  %563 = vst [vmem:[#allocation2 + $0xa0] sm:$0x70] %v531
  %564 = vst [vmem:[#allocation2 + $0xa8] sm:$0x70] %v532
  %565 = vst [vmem:[#allocation2 + $0xb0] sm:$0x70] %v533
  %566 = vst [vmem:[#allocation2 + $0xb8] sm:$0x70] %v534
  %567 = vst [vmem:[#allocation2 + $0xc0] sm:$0x70] %v535
  %568 = vst [vmem:[#allocation2 + $0xc8] sm:$0x70] %v536
  %569 = vst [vmem:[#allocation2 + $0xd0] sm:$0x70] %v537
  %570 = vst [vmem:[#allocation2 + $0xd8] sm:$0x70] %v538
  %571 = vst [vmem:[#allocation2 + $0xe0] sm:$0x70] %v539
  %572 = vst [vmem:[#allocation2 + $0xe8] sm:$0x70] %v540
  %573 = vst [vmem:[#allocation2 + $0xf0] sm:$0x70] %v541
  %574 = vst [vmem:[#allocation2 + $0xf8] sm:$0x70] %v542
  %v575 = vld [vmem:[%s0] sm:$0x77]
  %v576 = vld [vmem:[%s0 + $0x8] sm:$0x77]
  %v577 = vld [vmem:[%s0 + $0x10] sm:$0x77]
  %v578 = vld [vmem:[%s0 + $0x18] sm:$0x77]
  %v579 = vld [vmem:[%s0 + $0x20] sm:$0x77]
  %v580 = vld [vmem:[%s0 + $0x28] sm:$0x77]
  %v581 = vld [vmem:[%s0 + $0x30] sm:$0x77]
  %v582 = vld [vmem:[%s0 + $0x38] sm:$0x77]
  %v583 = vld [vmem:[%s0 + $0x40] sm:$0x7]
  %v593 = vcombine.high %v575, %v575
  %v594 = vcombine.high %v576, %v576
  %v595 = vcombine.high %v577, %v577
  %v596 = vcombine.high %v578, %v578
  %v597 = vcombine.high %v579, %v579
  %v598 = vcombine.high %v580, %v580
  %v599 = vcombine.high %v581, %v581
  %v600 = vcombine.high %v582, %v582
  %v601 = vrot.slane %v575, 1
  %v602 = vrot.slane %v593, 1
  %v603 = vrot.slane %v576, 1
  %v604 = vrot.slane %v594, 1
  %v605 = vrot.slane %v577, 1
  %v606 = vrot.slane %v595, 1
  %v607 = vrot.slane %v578, 1
  %v608 = vrot.slane %v596, 1
  %v609 = vrot.slane %v579, 1
  %v610 = vrot.slane %v597, 1
  %v611 = vrot.slane %v580, 1
  %v612 = vrot.slane %v598, 1
  %v613 = vrot.slane %v581, 1
  %v614 = vrot.slane %v599, 1
  %v615 = vrot.slane %v582, 1
  %v616 = vrot.slane %v600, 1
  %v617 = vrot.slane %v583, 1
  %618 = vrot.lane.b32.xlu0 %v601, 110
  %v619 = vpop.permute.xlu0 %618
  %620 = vrot.lane.b32.xlu0 %v602, 110
  %v621 = vpop.permute.xlu0 %620
  %622 = vrot.lane.b32.xlu0 %v603, 110
  %v623 = vpop.permute.xlu0 %622
  %624 = vrot.lane.b32.xlu0 %v604, 110
  %v625 = vpop.permute.xlu0 %624
  %626 = vrot.lane.b32.xlu0 %v605, 110
  %v627 = vpop.permute.xlu0 %626
  %628 = vrot.lane.b32.xlu0 %v606, 110
  %v629 = vpop.permute.xlu0 %628
  %630 = vrot.lane.b32.xlu0 %v607, 110
  %v631 = vpop.permute.xlu0 %630
  %632 = vrot.lane.b32.xlu0 %v608, 110
  %v633 = vpop.permute.xlu0 %632
  %634 = vrot.lane.b32.xlu0 %v609, 110
  %v635 = vpop.permute.xlu0 %634
  %636 = vrot.lane.b32.xlu0 %v610, 110
  %v637 = vpop.permute.xlu0 %636
  %638 = vrot.lane.b32.xlu0 %v611, 110
  %v639 = vpop.permute.xlu0 %638
  %640 = vrot.lane.b32.xlu0 %v612, 110
  %v641 = vpop.permute.xlu0 %640
  %642 = vrot.lane.b32.xlu0 %v613, 110
  %v643 = vpop.permute.xlu0 %642
  %644 = vrot.lane.b32.xlu0 %v614, 110
  %v645 = vpop.permute.xlu0 %644
  %646 = vrot.lane.b32.xlu0 %v615, 110
  %v647 = vpop.permute.xlu0 %646
  %648 = vrot.lane.b32.xlu0 %v616, 110
  %v649 = vpop.permute.xlu0 %648
  %650 = vrot.lane.b32.xlu0 %v617, 110
  %v651 = vpop.permute.xlu0 %650
  %vm652 = vcmask 900096
  %v653 = vsel %vm652, %v619, %v621
  %v654 = vsel %vm652, %v621, %v623
  %v655 = vsel %vm652, %v623, %v625
  %v656 = vsel %vm652, %v625, %v627
  %v657 = vsel %vm652, %v627, %v629
  %v658 = vsel %vm652, %v629, %v631
  %v659 = vsel %vm652, %v631, %v633
  %v660 = vsel %vm652, %v633, %v635
  %v661 = vsel %vm652, %v635, %v637
  %v662 = vsel %vm652, %v637, %v639
  %v663 = vsel %vm652, %v639, %v641
  %v664 = vsel %vm652, %v641, %v643
  %v665 = vsel %vm652, %v643, %v645
  %v666 = vsel %vm652, %v645, %v647
  %v667 = vsel %vm652, %v647, %v649
  %v668 = vsel %vm652, %v649, %v651
  %685 = vst [vmem:[#allocation2 + $0x80] sm:$0x80] %v653
  %686 = vst [vmem:[#allocation2 + $0x88] sm:$0x80] %v654
  %687 = vst [vmem:[#allocation2 + $0x90] sm:$0x80] %v655
  %688 = vst [vmem:[#allocation2 + $0x98] sm:$0x80] %v656
  %689 = vst [vmem:[#allocation2 + $0xa0] sm:$0x80] %v657
  %690 = vst [vmem:[#allocation2 + $0xa8] sm:$0x80] %v658
  %691 = vst [vmem:[#allocation2 + $0xb0] sm:$0x80] %v659
  %692 = vst [vmem:[#allocation2 + $0xb8] sm:$0x80] %v660
  %693 = vst [vmem:[#allocation2 + $0xc0] sm:$0x80] %v661
  %694 = vst [vmem:[#allocation2 + $0xc8] sm:$0x80] %v662
  %695 = vst [vmem:[#allocation2 + $0xd0] sm:$0x80] %v663
  %696 = vst [vmem:[#allocation2 + $0xd8] sm:$0x80] %v664
  %697 = vst [vmem:[#allocation2 + $0xe0] sm:$0x80] %v665
  %698 = vst [vmem:[#allocation2 + $0xe8] sm:$0x80] %v666
  %699 = vst [vmem:[#allocation2 + $0xf0] sm:$0x80] %v667
  %700 = vst [vmem:[#allocation2 + $0xf8] sm:$0x80] %v668
  %701 = vst [vmem:[#allocation2 + $0x100] sm:$0x3] %v653
  %702 = vst [vmem:[#allocation2 + $0x108] sm:$0x3] %v654
  %703 = vst [vmem:[#allocation2 + $0x110] sm:$0x3] %v655
  %704 = vst [vmem:[#allocation2 + $0x118] sm:$0x3] %v656
  %705 = vst [vmem:[#allocation2 + $0x120] sm:$0x3] %v657
  %706 = vst [vmem:[#allocation2 + $0x128] sm:$0x3] %v658
  %707 = vst [vmem:[#allocation2 + $0x130] sm:$0x3] %v659
  %708 = vst [vmem:[#allocation2 + $0x138] sm:$0x3] %v660
  %709 = vst [vmem:[#allocation2 + $0x140] sm:$0x3] %v661
  %710 = vst [vmem:[#allocation2 + $0x148] sm:$0x3] %v662
  %711 = vst [vmem:[#allocation2 + $0x150] sm:$0x3] %v663
  %712 = vst [vmem:[#allocation2 + $0x158] sm:$0x3] %v664
  %713 = vst [vmem:[#allocation2 + $0x160] sm:$0x3] %v665
  %714 = vst [vmem:[#allocation2 + $0x168] sm:$0x3] %v666
  %715 = vst [vmem:[#allocation2 + $0x170] sm:$0x3] %v667
  %716 = vst [vmem:[#allocation2 + $0x178] sm:$0x3] %v668
  %v717 = vld [vmem:[%s0] sm:$0x77]
  %v718 = vld [vmem:[%s0 + $0x8] sm:$0x77]
  %v719 = vld [vmem:[%s0 + $0x10] sm:$0x77]
  %v720 = vld [vmem:[%s0 + $0x18] sm:$0x77]
  %v721 = vld [vmem:[%s0 + $0x20] sm:$0x77]
  %v722 = vld [vmem:[%s0 + $0x28] sm:$0x77]
  %v723 = vld [vmem:[%s0 + $0x30] sm:$0x77]
  %v724 = vld [vmem:[%s0 + $0x38] sm:$0x77]
  %v725 = vld [vmem:[%s0 + $0x40] sm:$0x7]
  %v735 = vcombine.high %v717, %v717
  %v736 = vcombine.high %v718, %v718
  %v737 = vcombine.high %v719, %v719
  %v738 = vcombine.high %v720, %v720
  %v739 = vcombine.high %v721, %v721
  %v740 = vcombine.high %v722, %v722
  %v741 = vcombine.high %v723, %v723
  %v742 = vcombine.high %v724, %v724
  %v743 = vrot.slane %v717, 6
  %v744 = vrot.slane %v735, 6
  %v745 = vrot.slane %v718, 6
  %v746 = vrot.slane %v736, 6
  %v747 = vrot.slane %v719, 6
  %v748 = vrot.slane %v737, 6
  %v749 = vrot.slane %v720, 6
  %v750 = vrot.slane %v738, 6
  %v751 = vrot.slane %v721, 6
  %v752 = vrot.slane %v739, 6
  %v753 = vrot.slane %v722, 6
  %v754 = vrot.slane %v740, 6
  %v755 = vrot.slane %v723, 6
  %v756 = vrot.slane %v741, 6
  %v757 = vrot.slane %v724, 6
  %v758 = vrot.slane %v742, 6
  %v759 = vrot.slane %v725, 6
  %760 = vrot.lane.b32.xlu0 %v743, 96
  %v761 = vpop.permute.xlu0 %760
  %762 = vrot.lane.b32.xlu0 %v744, 96
  %v763 = vpop.permute.xlu0 %762
  %764 = vrot.lane.b32.xlu0 %v745, 96
  %v765 = vpop.permute.xlu0 %764
  %766 = vrot.lane.b32.xlu0 %v746, 96
  %v767 = vpop.permute.xlu0 %766
  %768 = vrot.lane.b32.xlu0 %v747, 96
  %v769 = vpop.permute.xlu0 %768
  %770 = vrot.lane.b32.xlu0 %v748, 96
  %v771 = vpop.permute.xlu0 %770
  %772 = vrot.lane.b32.xlu0 %v749, 96
  %v773 = vpop.permute.xlu0 %772
  %774 = vrot.lane.b32.xlu0 %v750, 96
  %v775 = vpop.permute.xlu0 %774
  %776 = vrot.lane.b32.xlu0 %v751, 96
  %v777 = vpop.permute.xlu0 %776
  %778 = vrot.lane.b32.xlu0 %v752, 96
  %v779 = vpop.permute.xlu0 %778
  %780 = vrot.lane.b32.xlu0 %v753, 96
  %v781 = vpop.permute.xlu0 %780
  %782 = vrot.lane.b32.xlu0 %v754, 96
  %v783 = vpop.permute.xlu0 %782
  %784 = vrot.lane.b32.xlu0 %v755, 96
  %v785 = vpop.permute.xlu0 %784
  %786 = vrot.lane.b32.xlu0 %v756, 96
  %v787 = vpop.permute.xlu0 %786
  %788 = vrot.lane.b32.xlu0 %v757, 96
  %v789 = vpop.permute.xlu0 %788
  %790 = vrot.lane.b32.xlu0 %v758, 96
  %v791 = vpop.permute.xlu0 %790
  %792 = vrot.lane.b32.xlu0 %v759, 96
  %v793 = vpop.permute.xlu0 %792
  %vm794 = vcmask 785408
  %v795 = vsel %vm794, %v761, %v763
  %v796 = vsel %vm794, %v763, %v765
  %v797 = vsel %vm794, %v765, %v767
  %v798 = vsel %vm794, %v767, %v769
  %v799 = vsel %vm794, %v769, %v771
  %v800 = vsel %vm794, %v771, %v773
  %v801 = vsel %vm794, %v773, %v775
  %v802 = vsel %vm794, %v775, %v777
  %v803 = vsel %vm794, %v777, %v779
  %v804 = vsel %vm794, %v779, %v781
  %v805 = vsel %vm794, %v781, %v783
  %v806 = vsel %vm794, %v783, %v785
  %v807 = vsel %vm794, %v785, %v787
  %v808 = vsel %vm794, %v787, %v789
  %v809 = vsel %vm794, %v789, %v791
  %v810 = vsel %vm794, %v791, %v793
  %827 = vst [vmem:[#allocation2 + $0x100] sm:$0x1c] %v795
  %828 = vst [vmem:[#allocation2 + $0x108] sm:$0x1c] %v796
  %829 = vst [vmem:[#allocation2 + $0x110] sm:$0x1c] %v797
  %830 = vst [vmem:[#allocation2 + $0x118] sm:$0x1c] %v798
  %831 = vst [vmem:[#allocation2 + $0x120] sm:$0x1c] %v799
  %832 = vst [vmem:[#allocation2 + $0x128] sm:$0x1c] %v800
  %833 = vst [vmem:[#allocation2 + $0x130] sm:$0x1c] %v801
  %834 = vst [vmem:[#allocation2 + $0x138] sm:$0x1c] %v802
  %835 = vst [vmem:[#allocation2 + $0x140] sm:$0x1c] %v803
  %836 = vst [vmem:[#allocation2 + $0x148] sm:$0x1c] %v804
  %837 = vst [vmem:[#allocation2 + $0x150] sm:$0x1c] %v805
  %838 = vst [vmem:[#allocation2 + $0x158] sm:$0x1c] %v806
  %839 = vst [vmem:[#allocation2 + $0x160] sm:$0x1c] %v807
  %840 = vst [vmem:[#allocation2 + $0x168] sm:$0x1c] %v808
  %841 = vst [vmem:[#allocation2 + $0x170] sm:$0x1c] %v809
  %842 = vst [vmem:[#allocation2 + $0x178] sm:$0x1c] %v810
  %v843 = vld [vmem:[%s0] sm:$0x77]
  %v844 = vld [vmem:[%s0 + $0x8] sm:$0x77]
  %v845 = vld [vmem:[%s0 + $0x10] sm:$0x77]
  %v846 = vld [vmem:[%s0 + $0x18] sm:$0x77]
  %v847 = vld [vmem:[%s0 + $0x20] sm:$0x77]
  %v848 = vld [vmem:[%s0 + $0x28] sm:$0x77]
  %v849 = vld [vmem:[%s0 + $0x30] sm:$0x77]
  %v850 = vld [vmem:[%s0 + $0x38] sm:$0x77]
  %v851 = vld [vmem:[%s0 + $0x40] sm:$0x7]
  %v861 = vcombine.high %v843, %v843
  %v862 = vcombine.high %v844, %v844
  %v863 = vcombine.high %v845, %v845
  %v864 = vcombine.high %v846, %v846
  %v865 = vcombine.high %v847, %v847
  %v866 = vcombine.high %v848, %v848
  %v867 = vcombine.high %v849, %v849
  %v868 = vcombine.high %v850, %v850
  %v869 = vrot.slane %v843, 3
  %v870 = vrot.slane %v861, 3
  %v871 = vrot.slane %v844, 3
  %v872 = vrot.slane %v862, 3
  %v873 = vrot.slane %v845, 3
  %v874 = vrot.slane %v863, 3
  %v875 = vrot.slane %v846, 3
  %v876 = vrot.slane %v864, 3
  %v877 = vrot.slane %v847, 3
  %v878 = vrot.slane %v865, 3
  %v879 = vrot.slane %v848, 3
  %v880 = vrot.slane %v866, 3
  %v881 = vrot.slane %v849, 3
  %v882 = vrot.slane %v867, 3
  %v883 = vrot.slane %v850, 3
  %v884 = vrot.slane %v868, 3
  %v885 = vrot.slane %v851, 3
  %886 = vrot.lane.b32.xlu0 %v869, 95
  %v887 = vpop.permute.xlu0 %886
  %888 = vrot.lane.b32.xlu0 %v870, 95
  %v889 = vpop.permute.xlu0 %888
  %890 = vrot.lane.b32.xlu0 %v871, 95
  %v891 = vpop.permute.xlu0 %890
  %892 = vrot.lane.b32.xlu0 %v872, 95
  %v893 = vpop.permute.xlu0 %892
  %894 = vrot.lane.b32.xlu0 %v873, 95
  %v895 = vpop.permute.xlu0 %894
  %896 = vrot.lane.b32.xlu0 %v874, 95
  %v897 = vpop.permute.xlu0 %896
  %898 = vrot.lane.b32.xlu0 %v875, 95
  %v899 = vpop.permute.xlu0 %898
  %900 = vrot.lane.b32.xlu0 %v876, 95
  %v901 = vpop.permute.xlu0 %900
  %902 = vrot.lane.b32.xlu0 %v877, 95
  %v903 = vpop.permute.xlu0 %902
  %904 = vrot.lane.b32.xlu0 %v878, 95
  %v905 = vpop.permute.xlu0 %904
  %906 = vrot.lane.b32.xlu0 %v879, 95
  %v907 = vpop.permute.xlu0 %906
  %908 = vrot.lane.b32.xlu0 %v880, 95
  %v909 = vpop.permute.xlu0 %908
  %910 = vrot.lane.b32.xlu0 %v881, 95
  %v911 = vpop.permute.xlu0 %910
  %912 = vrot.lane.b32.xlu0 %v882, 95
  %v913 = vpop.permute.xlu0 %912
  %914 = vrot.lane.b32.xlu0 %v883, 95
  %v915 = vpop.permute.xlu0 %914
  %916 = vrot.lane.b32.xlu0 %v884, 95
  %v917 = vpop.permute.xlu0 %916
  %918 = vrot.lane.b32.xlu0 %v885, 95
  %v919 = vpop.permute.xlu0 %918
  %vm920 = vcmask 777216
  %v921 = vsel %vm920, %v887, %v889
  %v922 = vsel %vm920, %v889, %v891
  %v923 = vsel %vm920, %v891, %v893
  %v924 = vsel %vm920, %v893, %v895
  %v925 = vsel %vm920, %v895, %v897
  %v926 = vsel %vm920, %v897, %v899
  %v927 = vsel %vm920, %v899, %v901
  %v928 = vsel %vm920, %v901, %v903
  %v929 = vsel %vm920, %v903, %v905
  %v930 = vsel %vm920, %v905, %v907
  %v931 = vsel %vm920, %v907, %v909
  %v932 = vsel %vm920, %v909, %v911
  %v933 = vsel %vm920, %v911, %v913
  %v934 = vsel %vm920, %v913, %v915
  %v935 = vsel %vm920, %v915, %v917
  %v936 = vsel %vm920, %v917, %v919
  %953 = vst [vmem:[#allocation2 + $0x100] sm:$0xe0] %v921
  %954 = vst [vmem:[#allocation2 + $0x108] sm:$0xe0] %v922
  %955 = vst [vmem:[#allocation2 + $0x110] sm:$0xe0] %v923
  %956 = vst [vmem:[#allocation2 + $0x118] sm:$0xe0] %v924
  %957 = vst [vmem:[#allocation2 + $0x120] sm:$0xe0] %v925
  %958 = vst [vmem:[#allocation2 + $0x128] sm:$0xe0] %v926
  %959 = vst [vmem:[#allocation2 + $0x130] sm:$0xe0] %v927
  %960 = vst [vmem:[#allocation2 + $0x138] sm:$0xe0] %v928
  %961 = vst [vmem:[#allocation2 + $0x140] sm:$0xe0] %v929
  %962 = vst [vmem:[#allocation2 + $0x148] sm:$0xe0] %v930
  %963 = vst [vmem:[#allocation2 + $0x150] sm:$0xe0] %v931
  %964 = vst [vmem:[#allocation2 + $0x158] sm:$0xe0] %v932
  %965 = vst [vmem:[#allocation2 + $0x160] sm:$0xe0] %v933
  %966 = vst [vmem:[#allocation2 + $0x168] sm:$0xe0] %v934
  %967 = vst [vmem:[#allocation2 + $0x170] sm:$0xe0] %v935
  %968 = vst [vmem:[#allocation2 + $0x178] sm:$0xe0] %v936
  %v969 = vld [vmem:[%s0] sm:$0x77]
  %v970 = vld [vmem:[%s0 + $0x8] sm:$0x77]
  %v971 = vld [vmem:[%s0 + $0x10] sm:$0x77]
  %v972 = vld [vmem:[%s0 + $0x18] sm:$0x77]
  %v973 = vld [vmem:[%s0 + $0x20] sm:$0x77]
  %v974 = vld [vmem:[%s0 + $0x28] sm:$0x77]
  %v975 = vld [vmem:[%s0 + $0x30] sm:$0x77]
  %v976 = vld [vmem:[%s0 + $0x38] sm:$0x77]
  %v977 = vld [vmem:[%s0 + $0x40] sm:$0x7]
  %v987 = vcombine.high %v969, %v969
  %v988 = vcombine.high %v970, %v970
  %v989 = vcombine.high %v971, %v971
  %v990 = vcombine.high %v972, %v972
  %v991 = vcombine.high %v973, %v973
  %v992 = vcombine.high %v974, %v974
  %v993 = vcombine.high %v975, %v975
  %v994 = vcombine.high %v976, %v976
  %995 = vrot.lane.b32.xlu0 %v969, 94
  %v996 = vpop.permute.xlu0 %995
  %997 = vrot.lane.b32.xlu0 %v987, 94
  %v998 = vpop.permute.xlu0 %997
  %999 = vrot.lane.b32.xlu0 %v970, 94
  %v1000 = vpop.permute.xlu0 %999
  %1001 = vrot.lane.b32.xlu0 %v988, 94
  %v1002 = vpop.permute.xlu0 %1001
  %1003 = vrot.lane.b32.xlu0 %v971, 94
  %v1004 = vpop.permute.xlu0 %1003
  %1005 = vrot.lane.b32.xlu0 %v989, 94
  %v1006 = vpop.permute.xlu0 %1005
  %1007 = vrot.lane.b32.xlu0 %v972, 94
  %v1008 = vpop.permute.xlu0 %1007
  %1009 = vrot.lane.b32.xlu0 %v990, 94
  %v1010 = vpop.permute.xlu0 %1009
  %1011 = vrot.lane.b32.xlu0 %v973, 94
  %v1012 = vpop.permute.xlu0 %1011
  %1013 = vrot.lane.b32.xlu0 %v991, 94
  %v1014 = vpop.permute.xlu0 %1013
  %1015 = vrot.lane.b32.xlu0 %v974, 94
  %v1016 = vpop.permute.xlu0 %1015
  %1017 = vrot.lane.b32.xlu0 %v992, 94
  %v1018 = vpop.permute.xlu0 %1017
  %1019 = vrot.lane.b32.xlu0 %v975, 94
  %v1020 = vpop.permute.xlu0 %1019
  %1021 = vrot.lane.b32.xlu0 %v993, 94
  %v1022 = vpop.permute.xlu0 %1021
  %1023 = vrot.lane.b32.xlu0 %v976, 94
  %v1024 = vpop.permute.xlu0 %1023
  %1025 = vrot.lane.b32.xlu0 %v994, 94
  %v1026 = vpop.permute.xlu0 %1025
  %1027 = vrot.lane.b32.xlu0 %v977, 94
  %v1028 = vpop.permute.xlu0 %1027
  %vm1029 = vcmask 769024
  %v1030 = vsel %vm1029, %v996, %v998
  %v1031 = vsel %vm1029, %v998, %v1000
  %v1032 = vsel %vm1029, %v1000, %v1002
  %v1033 = vsel %vm1029, %v1002, %v1004
  %v1034 = vsel %vm1029, %v1004, %v1006
  %v1035 = vsel %vm1029, %v1006, %v1008
  %v1036 = vsel %vm1029, %v1008, %v1010
  %v1037 = vsel %vm1029, %v1010, %v1012
  %v1038 = vsel %vm1029, %v1012, %v1014
  %v1039 = vsel %vm1029, %v1014, %v1016
  %v1040 = vsel %vm1029, %v1016, %v1018
  %v1041 = vsel %vm1029, %v1018, %v1020
  %v1042 = vsel %vm1029, %v1020, %v1022
  %v1043 = vsel %vm1029, %v1022, %v1024
  %v1044 = vsel %vm1029, %v1024, %v1026
  %v1045 = vsel %vm1029, %v1026, %v1028
  %1062 = vst [vmem:[#allocation2 + $0x180] sm:$0x7] %v1030
  %1063 = vst [vmem:[#allocation2 + $0x188] sm:$0x7] %v1031
  %1064 = vst [vmem:[#allocation2 + $0x190] sm:$0x7] %v1032
  %1065 = vst [vmem:[#allocation2 + $0x198] sm:$0x7] %v1033
  %1066 = vst [vmem:[#allocation2 + $0x1a0] sm:$0x7] %v1034
  %1067 = vst [vmem:[#allocation2 + $0x1a8] sm:$0x7] %v1035
  %1068 = vst [vmem:[#allocation2 + $0x1b0] sm:$0x7] %v1036
  %1069 = vst [vmem:[#allocation2 + $0x1b8] sm:$0x7] %v1037
  %1070 = vst [vmem:[#allocation2 + $0x1c0] sm:$0x7] %v1038
  %1071 = vst [vmem:[#allocation2 + $0x1c8] sm:$0x7] %v1039
  %1072 = vst [vmem:[#allocation2 + $0x1d0] sm:$0x7] %v1040
  %1073 = vst [vmem:[#allocation2 + $0x1d8] sm:$0x7] %v1041
  %1074 = vst [vmem:[#allocation2 + $0x1e0] sm:$0x7] %v1042
  %1075 = vst [vmem:[#allocation2 + $0x1e8] sm:$0x7] %v1043
  %1076 = vst [vmem:[#allocation2 + $0x1f0] sm:$0x7] %v1044
  %1077 = vst [vmem:[#allocation2 + $0x1f8] sm:$0x7] %v1045
  %v1078 = vld [vmem:[%s1] sm:$0xff]
  %v1079 = vld [vmem:[%s1 + $0x8] sm:$0xff]
  %v1080 = vld [vmem:[%s1 + $0x10] sm:$0xff]
  %v1081 = vld [vmem:[%s1 + $0x18] sm:$0xff]
  %v1082 = vld [vmem:[%s1 + $0x20] sm:$0xff]
  %v1083 = vld [vmem:[%s1 + $0x28] sm:$0xff]
  %v1084 = vld [vmem:[%s1 + $0x30] sm:$0xff]
  %v1085 = vld [vmem:[%s1 + $0x38] sm:$0xff]
  %v1086 = vld [vmem:[#allocation2] sm:$0xff]
  %v1087 = vld [vmem:[#allocation2 + $0x8] sm:$0xff]
  %v1088 = vld [vmem:[#allocation2 + $0x10] sm:$0xff]
  %v1089 = vld [vmem:[#allocation2 + $0x18] sm:$0xff]
  %v1090 = vld [vmem:[#allocation2 + $0x20] sm:$0xff]
  %v1091 = vld [vmem:[#allocation2 + $0x28] sm:$0xff]
  %v1092 = vld [vmem:[#allocation2 + $0x30] sm:$0xff]
  %v1093 = vld [vmem:[#allocation2 + $0x38] sm:$0xff]
  %v1094 = vld [vmem:[#allocation2 + $0x40] sm:$0xff]
  %v1095 = vld [vmem:[#allocation2 + $0x48] sm:$0xff]
  %v1096 = vld [vmem:[#allocation2 + $0x50] sm:$0xff]
  %v1097 = vld [vmem:[#allocation2 + $0x58] sm:$0xff]
  %v1098 = vld [vmem:[#allocation2 + $0x60] sm:$0xff]
  %v1099 = vld [vmem:[#allocation2 + $0x68] sm:$0xff]
  %v1100 = vld [vmem:[#allocation2 + $0x70] sm:$0xff]
  %v1101 = vld [vmem:[#allocation2 + $0x78] sm:$0xff]
  %v1102 = vld [vmem:[#allocation2 + $0x80] sm:$0xff]
  %v1103 = vld [vmem:[#allocation2 + $0x88] sm:$0xff]
  %v1104 = vld [vmem:[#allocation2 + $0x90] sm:$0xff]
  %v1105 = vld [vmem:[#allocation2 + $0x98] sm:$0xff]
  %v1106 = vld [vmem:[#allocation2 + $0xa0] sm:$0xff]
  %v1107 = vld [vmem:[#allocation2 + $0xa8] sm:$0xff]
  %v1108 = vld [vmem:[#allocation2 + $0xb0] sm:$0xff]
  %v1109 = vld [vmem:[#allocation2 + $0xb8] sm:$0xff]
  %v1110 = vld [vmem:[#allocation2 + $0xc0] sm:$0xff]
  %v1111 = vld [vmem:[#allocation2 + $0xc8] sm:$0xff]
  %v1112 = vld [vmem:[#allocation2 + $0xd0] sm:$0xff]
  %v1113 = vld [vmem:[#allocation2 + $0xd8] sm:$0xff]
  %v1114 = vld [vmem:[#allocation2 + $0xe0] sm:$0xff]
  %v1115 = vld [vmem:[#allocation2 + $0xe8] sm:$0xff]
  %v1116 = vld [vmem:[#allocation2 + $0xf0] sm:$0xff]
  %v1117 = vld [vmem:[#allocation2 + $0xf8] sm:$0xff]
  %v1118 = vld [vmem:[#allocation2 + $0x100] sm:$0xff]
  %v1119 = vld [vmem:[#allocation2 + $0x108] sm:$0xff]
  %v1120 = vld [vmem:[#allocation2 + $0x110] sm:$0xff]
  %v1121 = vld [vmem:[#allocation2 + $0x118] sm:$0xff]
  %v1122 = vld [vmem:[#allocation2 + $0x120] sm:$0xff]
  %v1123 = vld [vmem:[#allocation2 + $0x128] sm:$0xff]
  %v1124 = vld [vmem:[#allocation2 + $0x130] sm:$0xff]
  %v1125 = vld [vmem:[#allocation2 + $0x138] sm:$0xff]
  %v1126 = vld [vmem:[#allocation2 + $0x140] sm:$0xff]
  %v1127 = vld [vmem:[#allocation2 + $0x148] sm:$0xff]
  %v1128 = vld [vmem:[#allocation2 + $0x150] sm:$0xff]
  %v1129 = vld [vmem:[#allocation2 + $0x158] sm:$0xff]
  %v1130 = vld [vmem:[#allocation2 + $0x160] sm:$0xff]
  %v1131 = vld [vmem:[#allocation2 + $0x168] sm:$0xff]
  %v1132 = vld [vmem:[#allocation2 + $0x170] sm:$0xff]
  %v1133 = vld [vmem:[#allocation2 + $0x178] sm:$0xff]
  %v1134 = vld [vmem:[#allocation2 + $0x180] sm:$0x7]
  %v1135 = vld [vmem:[#allocation2 + $0x188] sm:$0x7]
  %v1136 = vld [vmem:[#allocation2 + $0x190] sm:$0x7]
  %v1137 = vld [vmem:[#allocation2 + $0x198] sm:$0x7]
  %v1138 = vld [vmem:[#allocation2 + $0x1a0] sm:$0x7]
  %v1139 = vld [vmem:[#allocation2 + $0x1a8] sm:$0x7]
  %v1140 = vld [vmem:[#allocation2 + $0x1b0] sm:$0x7]
  %v1141 = vld [vmem:[#allocation2 + $0x1b8] sm:$0x7]
  %v1142 = vld [vmem:[#allocation2 + $0x1c0] sm:$0x7]
  %v1143 = vld [vmem:[#allocation2 + $0x1c8] sm:$0x7]
  %v1144 = vld [vmem:[#allocation2 + $0x1d0] sm:$0x7]
  %v1145 = vld [vmem:[#allocation2 + $0x1d8] sm:$0x7]
  %v1146 = vld [vmem:[#allocation2 + $0x1e0] sm:$0x7]
  %v1147 = vld [vmem:[#allocation2 + $0x1e8] sm:$0x7]
  %v1148 = vld [vmem:[#allocation2 + $0x1f0] sm:$0x7]
  %v1149 = vld [vmem:[#allocation2 + $0x1f8] sm:$0x7]
  %v1150 = vld [vmem:[%s2] sm:$0xff]
  %v1151 = vld [vmem:[%s2 + $0x8] sm:$0xff]
  %v1152 = vld [vmem:[%s2 + $0x10] sm:$0xff]
  %v1153 = vld [vmem:[%s2 + $0x18] sm:$0xff]
  %v1154 = vld [vmem:[%s2 + $0x20] sm:$0xff]
  %v1155 = vld [vmem:[%s2 + $0x28] sm:$0xff]
  %v1156 = vld [vmem:[%s2 + $0x30] sm:$0xff]
  %v1157 = vld [vmem:[%s2 + $0x38] sm:$0xff]
  %1159 = vset.pattern.permute.xlu0 0
  %1160 = vperm.xlu0 %1159, %v1150
  %v1161 = vpop.permute.xlu0 %1160
  %1164 = vset.pattern.permute.xlu0 0
  %1165 = vperm.xlu0 %1164, %v1151
  %v1166 = vpop.permute.xlu0 %1165
  %1169 = vset.pattern.permute.xlu0 0
  %1170 = vperm.xlu0 %1169, %v1152
  %v1171 = vpop.permute.xlu0 %1170
  %1174 = vset.pattern.permute.xlu0 0
  %1175 = vperm.xlu0 %1174, %v1153
  %v1176 = vpop.permute.xlu0 %1175
  %1179 = vset.pattern.permute.xlu0 0
  %1180 = vperm.xlu0 %1179, %v1154
  %v1181 = vpop.permute.xlu0 %1180
  %1184 = vset.pattern.permute.xlu0 0
  %1185 = vperm.xlu0 %1184, %v1155
  %v1186 = vpop.permute.xlu0 %1185
  %1189 = vset.pattern.permute.xlu0 0
  %1190 = vperm.xlu0 %1189, %v1156
  %v1191 = vpop.permute.xlu0 %1190
  %1194 = vset.pattern.permute.xlu0 0
  %1195 = vperm.xlu0 %1194, %v1157
  %v1196 = vpop.permute.xlu0 %1195
  %vm1198 = vcmask 220160
  %v1200 = vsel %vm1198, %v1078, 0
  %v1203 = vsel %vm1198, %v1079, 0
  %v1206 = vsel %vm1198, %v1080, 0
  %v1209 = vsel %vm1198, %v1081, 0
  %v1212 = vsel %vm1198, %v1082, 0
  %v1215 = vsel %vm1198, %v1083, 0
  %v1218 = vsel %vm1198, %v1084, 0
  %v1221 = vsel %vm1198, %v1085, 0
  %vm1223 = vcmask 1042432
  %v1225 = vsel %vm1223, %v1134, 0
  %v1228 = vsel %vm1223, %v1135, 0
  %v1231 = vsel %vm1223, %v1136, 0
  %v1234 = vsel %vm1223, %v1137, 0
  %v1237 = vsel %vm1223, %v1138, 0
  %v1240 = vsel %vm1223, %v1139, 0
  %v1243 = vsel %vm1223, %v1140, 0
  %v1246 = vsel %vm1223, %v1141, 0
  %v1249 = vsel %vm1223, %v1142, 0
  %v1252 = vsel %vm1223, %v1143, 0
  %v1255 = vsel %vm1223, %v1144, 0
  %v1258 = vsel %vm1223, %v1145, 0
  %v1261 = vsel %vm1223, %v1146, 0
  %v1264 = vsel %vm1223, %v1147, 0
  %v1267 = vsel %vm1223, %v1148, 0
  %v1270 = vsel %vm1223, %v1149, 0
  %1272 = vmatprep.subr.mxu0 %v1087
  %1273 = vmatpush1.msra.mxu0 %v1086
  %1274 = vmatprep.subr.mxu0 %v1103
  %1275 = vmatpush1.msra.mxu0 %v1102
  %1276 = vmatprep.subr.mxu0 %v1119
  %1277 = vmatpush1.msra.mxu0 %v1118
  %1278 = vmatprep.subr.mxu0 %v1228
  %1279 = vmatpush1.msra.mxu0 %v1225
  %1280 = vmatprep.subr.mxu0 0.0
  %1281 = vmatpush1.msra.mxu0 0.0
  %1282 = vmatprep.subr.mxu0 0.0
  %1283 = vmatpush1.msra.mxu0 0.0
  %1284 = vmatprep.subr.mxu0 0.0
  %1285 = vmatpush1.msra.mxu0 0.0
  %1286 = vmatprep.subr.mxu0 0.0
  %1287 = vmatpush1.msra.mxu0 0.0
  %1288 = vmatprep.subr.mxu0 0.0
  %1289 = vmatpush1.msra.mxu0 0.0
  %1290 = vmatprep.subr.mxu0 0.0
  %1291 = vmatpush1.msra.mxu0 0.0
  %1292 = vmatprep.subr.mxu0 0.0
  %1293 = vmatpush1.msra.mxu0 0.0
  %1294 = vmatprep.subr.mxu0 0.0
  %1295 = vmatpush1.msra.mxu0 0.0
  %1296 = vmatprep.subr.mxu0 0.0
  %1297 = vmatpush1.msra.mxu0 0.0
  %1298 = vmatprep.subr.mxu0 0.0
  %1299 = vmatpush1.msra.mxu0 0.0
  %1300 = vmatprep.subr.mxu0 0.0
  %1301 = vmatpush1.msra.mxu0 0.0
  %1302 = vmatprep.subr.mxu0 0.0
  %1303 = vmatpush1.msra.mxu0 0.0
  %1304 = vmatprep.subr.mxu0 0.0
  %1305 = vmatpush1.msra.mxu0 0.0
  %1306 = vmatprep.subr.mxu0 0.0
  %1307 = vmatpush1.msra.mxu0 0.0
  %1308 = vmatprep.subr.mxu0 0.0
  %1309 = vmatpush1.msra.mxu0 0.0
  %1310 = vmatprep.subr.mxu0 0.0
  %1311 = vmatpush1.msra.mxu0 0.0
  %1312 = vmatprep.subr.mxu0 0.0
  %1313 = vmatpush1.msra.mxu0 0.0
  %1314 = vmatprep.subr.mxu0 0.0
  %1315 = vmatpush1.msra.mxu0 0.0
  %1316 = vmatprep.subr.mxu0 0.0
  %1317 = vmatpush1.msra.mxu0 0.0
  %1318 = vmatprep.subr.mxu0 0.0
  %1319 = vmatpush1.msra.mxu0 0.0
  %1320 = vmatprep.subr.mxu0 0.0
  %1321 = vmatpush1.msra.mxu0 0.0
  %1322 = vmatprep.subr.mxu0 0.0
  %1323 = vmatpush1.msra.mxu0 0.0
  %1324 = vmatprep.subr.mxu0 0.0
  %1325 = vmatpush1.msra.mxu0 0.0
  %1326 = vmatprep.subr.mxu0 0.0
  %1327 = vmatpush1.msra.mxu0 0.0
  %1328 = vmatprep.subr.mxu0 0.0
  %1329 = vmatpush1.msra.mxu0 0.0
  %1330 = vmatprep.subr.mxu0 0.0
  %1331 = vmatpush1.msra.mxu0 0.0
  %1332 = vmatprep.subr.mxu0 0.0
  %1333 = vmatpush1.msra.mxu0 0.0
  %1334 = vmatprep.subr.mxu0 0.0
  %1335 = vmatpush1.msra.mxu0 0.0
  %1336 = vmatprep.mubr.f32.mxu0 0.0
  %1337 = vmatmul.mubr.f32.gmra.mrb[0].mxu0 %v1200
  %v1338 = vpop.f32.mrb[0].mxu0
  %v1339 = vadd.f32 %v1161, %v1338
  %v1340 = vpop.f32.mrb[0].mxu0
  %v1341 = vadd.f32 %v1161, %v1340
  %1342 = vmatprep.mubr.f32.mxu0 0.0
  %1343 = vmatmul.mubr.f32.gmra.mrb[0].mxu0 %v1203
  %v1344 = vpop.f32.mrb[0].mxu0
  %v1345 = vadd.f32 %v1166, %v1344
  %v1346 = vpop.f32.mrb[0].mxu0
  %v1347 = vadd.f32 %v1166, %v1346
  %1348 = vmatprep.mubr.f32.mxu0 0.0
  %1349 = vmatmul.mubr.f32.gmra.mrb[0].mxu0 %v1206
  %v1350 = vpop.f32.mrb[0].mxu0
  %v1351 = vadd.f32 %v1171, %v1350
  %v1352 = vpop.f32.mrb[0].mxu0
  %v1353 = vadd.f32 %v1171, %v1352
  %1354 = vmatprep.mubr.f32.mxu0 0.0
  %1355 = vmatmul.mubr.f32.gmra.mrb[0].mxu0 %v1209
  %v1356 = vpop.f32.mrb[0].mxu0
  %v1357 = vadd.f32 %v1176, %v1356
  %v1358 = vpop.f32.mrb[0].mxu0
  %v1359 = vadd.f32 %v1176, %v1358
  %1360 = vmatprep.mubr.f32.mxu0 0.0
  %1361 = vmatmul.mubr.f32.gmra.mrb[0].mxu0 %v1212
  %v1362 = vpop.f32.mrb[0].mxu0
  %v1363 = vadd.f32 %v1181, %v1362
  %v1364 = vpop.f32.mrb[0].mxu0
  %v1365 = vadd.f32 %v1181, %v1364
  %1366 = vmatprep.mubr.f32.mxu0 0.0
  %1367 = vmatmul.mubr.f32.gmra.mrb[0].mxu0 %v1215
  %v1368 = vpop.f32.mrb[0].mxu0
  %v1369 = vadd.f32 %v1186, %v1368
  %v1370 = vpop.f32.mrb[0].mxu0
  %v1371 = vadd.f32 %v1186, %v1370
  %1372 = vmatprep.mubr.f32.mxu0 0.0
  %1373 = vmatmul.mubr.f32.gmra.mrb[0].mxu0 %v1218
  %v1374 = vpop.f32.mrb[0].mxu0
  %v1375 = vadd.f32 %v1191, %v1374
  %v1376 = vpop.f32.mrb[0].mxu0
  %v1377 = vadd.f32 %v1191, %v1376
  %1378 = vmatprep.mubr.f32.mxu0 0.0
  %1379 = vmatmul.mubr.f32.gmra.mrb[0].mxu0 %v1221
  %v1380 = vpop.f32.mrb[0].mxu0
  %v1381 = vadd.f32 %v1196, %v1380
  %v1382 = vpop.f32.mrb[0].mxu0
  %v1383 = vadd.f32 %v1196, %v1382
  %1384 = vdwg.mxu0
  %1385 = vmatprep.subr.mxu0 %v1089
  %1386 = vmatpush1.msra.mxu0 %v1088
  %1387 = vmatprep.subr.mxu0 %v1105
  %1388 = vmatpush1.msra.mxu0 %v1104
  %1389 = vmatprep.subr.mxu0 %v1121
  %1390 = vmatpush1.msra.mxu0 %v1120
  %1391 = vmatprep.subr.mxu0 %v1234
  %1392 = vmatpush1.msra.mxu0 %v1231
  %1393 = vmatprep.subr.mxu0 0.0
  %1394 = vmatpush1.msra.mxu0 0.0
  %1395 = vmatprep.subr.mxu0 0.0
  %1396 = vmatpush1.msra.mxu0 0.0
  %1397 = vmatprep.subr.mxu0 0.0
  %1398 = vmatpush1.msra.mxu0 0.0
  %1399 = vmatprep.subr.mxu0 0.0
  %1400 = vmatpush1.msra.mxu0 0.0
  %1401 = vmatprep.subr.mxu0 0.0
  %1402 = vmatpush1.msra.mxu0 0.0
  %1403 = vmatprep.subr.mxu0 0.0
  %1404 = vmatpush1.msra.mxu0 0.0
  %1405 = vmatprep.subr.mxu0 0.0
  %1406 = vmatpush1.msra.mxu0 0.0
  %1407 = vmatprep.subr.mxu0 0.0
  %1408 = vmatpush1.msra.mxu0 0.0
  %1409 = vmatprep.subr.mxu0 0.0
  %1410 = vmatpush1.msra.mxu0 0.0
  %1411 = vmatprep.subr.mxu0 0.0
  %1412 = vmatpush1.msra.mxu0 0.0
  %1413 = vmatprep.subr.mxu0 0.0
  %1414 = vmatpush1.msra.mxu0 0.0
  %1415 = vmatprep.subr.mxu0 0.0
  %1416 = vmatpush1.msra.mxu0 0.0
  %1417 = vmatprep.subr.mxu0 0.0
  %1418 = vmatpush1.msra.mxu0 0.0
  %1419 = vmatprep.subr.mxu0 0.0
  %1420 = vmatpush1.msra.mxu0 0.0
  %1421 = vmatprep.subr.mxu0 0.0
  %1422 = vmatpush1.msra.mxu0 0.0
  %1423 = vmatprep.subr.mxu0 0.0
  %1424 = vmatpush1.msra.mxu0 0.0
  %1425 = vmatprep.subr.mxu0 0.0
  %1426 = vmatpush1.msra.mxu0 0.0
  %1427 = vmatprep.subr.mxu0 0.0
  %1428 = vmatpush1.msra.mxu0 0.0
  %1429 = vmatprep.subr.mxu0 0.0
  %1430 = vmatpush1.msra.mxu0 0.0
  %1431 = vmatprep.subr.mxu0 0.0
  %1432 = vmatpush1.msra.mxu0 0.0
  %1433 = vmatprep.subr.mxu0 0.0
  %1434 = vmatpush1.msra.mxu0 0.0
  %1435 = vmatprep.subr.mxu0 0.0
  %1436 = vmatpush1.msra.mxu0 0.0
  %1437 = vmatprep.subr.mxu0 0.0
  %1438 = vmatpush1.msra.mxu0 0.0
  %1439 = vmatprep.subr.mxu0 0.0
  %1440 = vmatpush1.msra.mxu0 0.0
  %1441 = vmatprep.subr.mxu0 0.0
  %1442 = vmatpush1.msra.mxu0 0.0
  %1443 = vmatprep.subr.mxu0 0.0
  %1444 = vmatpush1.msra.mxu0 0.0
  %1445 = vmatprep.subr.mxu0 0.0
  %1446 = vmatpush1.msra.mxu0 0.0
  %1447 = vmatprep.subr.mxu0 0.0
  %1448 = vmatpush1.msra.mxu0 0.0
  %1449 = vmatprep.mubr.f32.mxu0 0.0
  %1450 = vmatmul.mubr.f32.gmra.mrb[0].mxu0 %v1200
  %v1451 = vpop.f32.mrb[0].mxu0
  %v1452 = vadd.f32 %v1161, %v1451
  %v1453 = vpop.f32.mrb[0].mxu0
  %v1454 = vadd.f32 %v1161, %v1453
  %1455 = vmatprep.mubr.f32.mxu0 0.0
  %1456 = vmatmul.mubr.f32.gmra.mrb[0].mxu0 %v1203
  %v1457 = vpop.f32.mrb[0].mxu0
  %v1458 = vadd.f32 %v1166, %v1457
  %v1459 = vpop.f32.mrb[0].mxu0
  %v1460 = vadd.f32 %v1166, %v1459
  %1461 = vmatprep.mubr.f32.mxu0 0.0
  %1462 = vmatmul.mubr.f32.gmra.mrb[0].mxu0 %v1206
  %v1463 = vpop.f32.mrb[0].mxu0
  %v1464 = vadd.f32 %v1171, %v1463
  %v1465 = vpop.f32.mrb[0].mxu0
  %v1466 = vadd.f32 %v1171, %v1465
  %1467 = vmatprep.mubr.f32.mxu0 0.0
  %1468 = vmatmul.mubr.f32.gmra.mrb[0].mxu0 %v1209
  %v1469 = vpop.f32.mrb[0].mxu0
  %v1470 = vadd.f32 %v1176, %v1469
  %v1471 = vpop.f32.mrb[0].mxu0
  %v1472 = vadd.f32 %v1176, %v1471
  %1473 = vmatprep.mubr.f32.mxu0 0.0
  %1474 = vmatmul.mubr.f32.gmra.mrb[0].mxu0 %v1212
  %v1475 = vpop.f32.mrb[0].mxu0
  %v1476 = vadd.f32 %v1181, %v1475
  %v1477 = vpop.f32.mrb[0].mxu0
  %v1478 = vadd.f32 %v1181, %v1477
  %1479 = vmatprep.mubr.f32.mxu0 0.0
  %1480 = vmatmul.mubr.f32.gmra.mrb[0].mxu0 %v1215
  %v1481 = vpop.f32.mrb[0].mxu0
  %v1482 = vadd.f32 %v1186, %v1481
  %v1483 = vpop.f32.mrb[0].mxu0
  %v1484 = vadd.f32 %v1186, %v1483
  %1485 = vmatprep.mubr.f32.mxu0 0.0
  %1486 = vmatmul.mubr.f32.gmra.mrb[0].mxu0 %v1218
  %v1487 = vpop.f32.mrb[0].mxu0
  %v1488 = vadd.f32 %v1191, %v1487
  %v1489 = vpop.f32.mrb[0].mxu0
  %v1490 = vadd.f32 %v1191, %v1489
  %1491 = vmatprep.mubr.f32.mxu0 0.0
  %1492 = vmatmul.mubr.f32.gmra.mrb[0].mxu0 %v1221
  %v1493 = vpop.f32.mrb[0].mxu0
  %v1494 = vadd.f32 %v1196, %v1493
  %v1495 = vpop.f32.mrb[0].mxu0
  %v1496 = vadd.f32 %v1196, %v1495
  %1497 = vdwg.mxu0
  %1498 = vmatprep.subr.mxu0 %v1091
  %1499 = vmatpush1.msra.mxu0 %v1090
  %1500 = vmatprep.subr.mxu0 %v1107
  %1501 = vmatpush1.msra.mxu0 %v1106
  %1502 = vmatprep.subr.mxu0 %v1123
  %1503 = vmatpush1.msra.mxu0 %v1122
  %1504 = vmatprep.subr.mxu0 %v1240
  %1505 = vmatpush1.msra.mxu0 %v1237
  %1506 = vmatprep.subr.mxu0 0.0
  %1507 = vmatpush1.msra.mxu0 0.0
  %1508 = vmatprep.subr.mxu0 0.0
  %1509 = vmatpush1.msra.mxu0 0.0
  %1510 = vmatprep.subr.mxu0 0.0
  %1511 = vmatpush1.msra.mxu0 0.0
  %1512 = vmatprep.subr.mxu0 0.0
  %1513 = vmatpush1.msra.mxu0 0.0
  %1514 = vmatprep.subr.mxu0 0.0
  %1515 = vmatpush1.msra.mxu0 0.0
  %1516 = vmatprep.subr.mxu0 0.0
  %1517 = vmatpush1.msra.mxu0 0.0
  %1518 = vmatprep.subr.mxu0 0.0
  %1519 = vmatpush1.msra.mxu0 0.0
  %1520 = vmatprep.subr.mxu0 0.0
  %1521 = vmatpush1.msra.mxu0 0.0
  %1522 = vmatprep.subr.mxu0 0.0
  %1523 = vmatpush1.msra.mxu0 0.0
  %1524 = vmatprep.subr.mxu0 0.0
  %1525 = vmatpush1.msra.mxu0 0.0
  %1526 = vmatprep.subr.mxu0 0.0
  %1527 = vmatpush1.msra.mxu0 0.0
  %1528 = vmatprep.subr.mxu0 0.0
  %1529 = vmatpush1.msra.mxu0 0.0
  %1530 = vmatprep.subr.mxu0 0.0
  %1531 = vmatpush1.msra.mxu0 0.0
  %1532 = vmatprep.subr.mxu0 0.0
  %1533 = vmatpush1.msra.mxu0 0.0
  %1534 = vmatprep.subr.mxu0 0.0
  %1535 = vmatpush1.msra.mxu0 0.0
  %1536 = vmatprep.subr.mxu0 0.0
  %1537 = vmatpush1.msra.mxu0 0.0
  %1538 = vmatprep.subr.mxu0 0.0
  %1539 = vmatpush1.msra.mxu0 0.0
  %1540 = vmatprep.subr.mxu0 0.0
  %1541 = vmatpush1.msra.mxu0 0.0
  %1542 = vmatprep.subr.mxu0 0.0
  %1543 = vmatpush1.msra.mxu0 0.0
  %1544 = vmatprep.subr.mxu0 0.0
  %1545 = vmatpush1.msra.mxu0 0.0
  %1546 = vmatprep.subr.mxu0 0.0
  %1547 = vmatpush1.msra.mxu0 0.0
  %1548 = vmatprep.subr.mxu0 0.0
  %1549 = vmatpush1.msra.mxu0 0.0
  %1550 = vmatprep.subr.mxu0 0.0
  %1551 = vmatpush1.msra.mxu0 0.0
  %1552 = vmatprep.subr.mxu0 0.0
  %1553 = vmatpush1.msra.mxu0 0.0
  %1554 = vmatprep.subr.mxu0 0.0
  %1555 = vmatpush1.msra.mxu0 0.0
  %1556 = vmatprep.subr.mxu0 0.0
  %1557 = vmatpush1.msra.mxu0 0.0
  %1558 = vmatprep.subr.mxu0 0.0
  %1559 = vmatpush1.msra.mxu0 0.0
  %1560 = vmatprep.subr.mxu0 0.0
  %1561 = vmatpush1.msra.mxu0 0.0
  %1562 = vmatprep.mubr.f32.mxu0 0.0
  %1563 = vmatmul.mubr.f32.gmra.mrb[0].mxu0 %v1200
  %v1564 = vpop.f32.mrb[0].mxu0
  %v1565 = vadd.f32 %v1161, %v1564
  %v1566 = vpop.f32.mrb[0].mxu0
  %v1567 = vadd.f32 %v1161, %v1566
  %1568 = vmatprep.mubr.f32.mxu0 0.0
  %1569 = vmatmul.mubr.f32.gmra.mrb[0].mxu0 %v1203
  %v1570 = vpop.f32.mrb[0].mxu0
  %v1571 = vadd.f32 %v1166, %v1570
  %v1572 = vpop.f32.mrb[0].mxu0
  %v1573 = vadd.f32 %v1166, %v1572
  %1574 = vmatprep.mubr.f32.mxu0 0.0
  %1575 = vmatmul.mubr.f32.gmra.mrb[0].mxu0 %v1206
  %v1576 = vpop.f32.mrb[0].mxu0
  %v1577 = vadd.f32 %v1171, %v1576
  %v1578 = vpop.f32.mrb[0].mxu0
  %v1579 = vadd.f32 %v1171, %v1578
  %1580 = vmatprep.mubr.f32.mxu0 0.0
  %1581 = vmatmul.mubr.f32.gmra.mrb[0].mxu0 %v1209
  %v1582 = vpop.f32.mrb[0].mxu0
  %v1583 = vadd.f32 %v1176, %v1582
  %v1584 = vpop.f32.mrb[0].mxu0
  %v1585 = vadd.f32 %v1176, %v1584
  %1586 = vmatprep.mubr.f32.mxu0 0.0
  %1587 = vmatmul.mubr.f32.gmra.mrb[0].mxu0 %v1212
  %v1588 = vpop.f32.mrb[0].mxu0
  %v1589 = vadd.f32 %v1181, %v1588
  %v1590 = vpop.f32.mrb[0].mxu0
  %v1591 = vadd.f32 %v1181, %v1590
  %1592 = vmatprep.mubr.f32.mxu0 0.0
  %1593 = vmatmul.mubr.f32.gmra.mrb[0].mxu0 %v1215
  %v1594 = vpop.f32.mrb[0].mxu0
  %v1595 = vadd.f32 %v1186, %v1594
  %v1596 = vpop.f32.mrb[0].mxu0
  %v1597 = vadd.f32 %v1186, %v1596
  %1598 = vmatprep.mubr.f32.mxu0 0.0
  %1599 = vmatmul.mubr.f32.gmra.mrb[0].mxu0 %v1218
  %v1600 = vpop.f32.mrb[0].mxu0
  %v1601 = vadd.f32 %v1191, %v1600
  %v1602 = vpop.f32.mrb[0].mxu0
  %v1603 = vadd.f32 %v1191, %v1602
  %1604 = vmatprep.mubr.f32.mxu0 0.0
  %1605 = vmatmul.mubr.f32.gmra.mrb[0].mxu0 %v1221
  %v1606 = vpop.f32.mrb[0].mxu0
  %v1607 = vadd.f32 %v1196, %v1606
  %v1608 = vpop.f32.mrb[0].mxu0
  %v1609 = vadd.f32 %v1196, %v1608
  %1610 = vdwg.mxu0
  %1611 = vmatprep.subr.mxu0 %v1093
  %1612 = vmatpush1.msra.mxu0 %v1092
  %1613 = vmatprep.subr.mxu0 %v1109
  %1614 = vmatpush1.msra.mxu0 %v1108
  %1615 = vmatprep.subr.mxu0 %v1125
  %1616 = vmatpush1.msra.mxu0 %v1124
  %1617 = vmatprep.subr.mxu0 %v1246
  %1618 = vmatpush1.msra.mxu0 %v1243
  %1619 = vmatprep.subr.mxu0 0.0
  %1620 = vmatpush1.msra.mxu0 0.0
  %1621 = vmatprep.subr.mxu0 0.0
  %1622 = vmatpush1.msra.mxu0 0.0
  %1623 = vmatprep.subr.mxu0 0.0
  %1624 = vmatpush1.msra.mxu0 0.0
  %1625 = vmatprep.subr.mxu0 0.0
  %1626 = vmatpush1.msra.mxu0 0.0
  %1627 = vmatprep.subr.mxu0 0.0
  %1628 = vmatpush1.msra.mxu0 0.0
  %1629 = vmatprep.subr.mxu0 0.0
  %1630 = vmatpush1.msra.mxu0 0.0
  %1631 = vmatprep.subr.mxu0 0.0
  %1632 = vmatpush1.msra.mxu0 0.0
  %1633 = vmatprep.subr.mxu0 0.0
  %1634 = vmatpush1.msra.mxu0 0.0
  %1635 = vmatprep.subr.mxu0 0.0
  %1636 = vmatpush1.msra.mxu0 0.0
  %1637 = vmatprep.subr.mxu0 0.0
  %1638 = vmatpush1.msra.mxu0 0.0
  %1639 = vmatprep.subr.mxu0 0.0
  %1640 = vmatpush1.msra.mxu0 0.0
  %1641 = vmatprep.subr.mxu0 0.0
  %1642 = vmatpush1.msra.mxu0 0.0
  %1643 = vmatprep.subr.mxu0 0.0
  %1644 = vmatpush1.msra.mxu0 0.0
  %1645 = vmatprep.subr.mxu0 0.0
  %1646 = vmatpush1.msra.mxu0 0.0
  %1647 = vmatprep.subr.mxu0 0.0
  %1648 = vmatpush1.msra.mxu0 0.0
  %1649 = vmatprep.subr.mxu0 0.0
  %1650 = vmatpush1.msra.mxu0 0.0
  %1651 = vmatprep.subr.mxu0 0.0
  %1652 = vmatpush1.msra.mxu0 0.0
  %1653 = vmatprep.subr.mxu0 0.0
  %1654 = vmatpush1.msra.mxu0 0.0
  %1655 = vmatprep.subr.mxu0 0.0
  %1656 = vmatpush1.msra.mxu0 0.0
  %1657 = vmatprep.subr.mxu0 0.0
  %1658 = vmatpush1.msra.mxu0 0.0
  %1659 = vmatprep.subr.mxu0 0.0
  %1660 = vmatpush1.msra.mxu0 0.0
  %1661 = vmatprep.subr.mxu0 0.0
  %1662 = vmatpush1.msra.mxu0 0.0
  %1663 = vmatprep.subr.mxu0 0.0
  %1664 = vmatpush1.msra.mxu0 0.0
  %1665 = vmatprep.subr.mxu0 0.0
  %1666 = vmatpush1.msra.mxu0 0.0
  %1667 = vmatprep.subr.mxu0 0.0
  %1668 = vmatpush1.msra.mxu0 0.0
  %1669 = vmatprep.subr.mxu0 0.0
  %1670 = vmatpush1.msra.mxu0 0.0
  %1671 = vmatprep.subr.mxu0 0.0
  %1672 = vmatpush1.msra.mxu0 0.0
  %1673 = vmatprep.subr.mxu0 0.0
  %1674 = vmatpush1.msra.mxu0 0.0
  %1675 = vmatprep.mubr.f32.mxu0 0.0
  %1676 = vmatmul.mubr.f32.gmra.mrb[0].mxu0 %v1200
  %v1677 = vpop.f32.mrb[0].mxu0
  %v1678 = vadd.f32 %v1161, %v1677
  %v1679 = vpop.f32.mrb[0].mxu0
  %v1680 = vadd.f32 %v1161, %v1679
  %1681 = vmatprep.mubr.f32.mxu0 0.0
  %1682 = vmatmul.mubr.f32.gmra.mrb[0].mxu0 %v1203
  %v1683 = vpop.f32.mrb[0].mxu0
  %v1684 = vadd.f32 %v1166, %v1683
  %v1685 = vpop.f32.mrb[0].mxu0
  %v1686 = vadd.f32 %v1166, %v1685
  %1687 = vmatprep.mubr.f32.mxu0 0.0
  %1688 = vmatmul.mubr.f32.gmra.mrb[0].mxu0 %v1206
  %v1689 = vpop.f32.mrb[0].mxu0
  %v1690 = vadd.f32 %v1171, %v1689
  %v1691 = vpop.f32.mrb[0].mxu0
  %v1692 = vadd.f32 %v1171, %v1691
  %1693 = vmatprep.mubr.f32.mxu0 0.0
  %1694 = vmatmul.mubr.f32.gmra.mrb[0].mxu0 %v1209
  %v1695 = vpop.f32.mrb[0].mxu0
  %v1696 = vadd.f32 %v1176, %v1695
  %v1697 = vpop.f32.mrb[0].mxu0
  %v1698 = vadd.f32 %v1176, %v1697
  %1699 = vmatprep.mubr.f32.mxu0 0.0
  %1700 = vmatmul.mubr.f32.gmra.mrb[0].mxu0 %v1212
  %v1701 = vpop.f32.mrb[0].mxu0
  %v1702 = vadd.f32 %v1181, %v1701
  %v1703 = vpop.f32.mrb[0].mxu0
  %v1704 = vadd.f32 %v1181, %v1703
  %1705 = vmatprep.mubr.f32.mxu0 0.0
  %1706 = vmatmul.mubr.f32.gmra.mrb[0].mxu0 %v1215
  %v1707 = vpop.f32.mrb[0].mxu0
  %v1708 = vadd.f32 %v1186, %v1707
  %v1709 = vpop.f32.mrb[0].mxu0
  %v1710 = vadd.f32 %v1186, %v1709
  %1711 = vmatprep.mubr.f32.mxu0 0.0
  %1712 = vmatmul.mubr.f32.gmra.mrb[0].mxu0 %v1218
  %v1713 = vpop.f32.mrb[0].mxu0
  %v1714 = vadd.f32 %v1191, %v1713
  %v1715 = vpop.f32.mrb[0].mxu0
  %v1716 = vadd.f32 %v1191, %v1715
  %1717 = vmatprep.mubr.f32.mxu0 0.0
  %1718 = vmatmul.mubr.f32.gmra.mrb[0].mxu0 %v1221
  %v1719 = vpop.f32.mrb[0].mxu0
  %v1720 = vadd.f32 %v1196, %v1719
  %v1721 = vpop.f32.mrb[0].mxu0
  %v1722 = vadd.f32 %v1196, %v1721
  %1723 = vdwg.mxu0
  %1724 = vmatprep.subr.mxu0 %v1095
  %1725 = vmatpush1.msra.mxu0 %v1094
  %1726 = vmatprep.subr.mxu0 %v1111
  %1727 = vmatpush1.msra.mxu0 %v1110
  %1728 = vmatprep.subr.mxu0 %v1127
  %1729 = vmatpush1.msra.mxu0 %v1126
  %1730 = vmatprep.subr.mxu0 %v1252
  %1731 = vmatpush1.msra.mxu0 %v1249
  %1732 = vmatprep.subr.mxu0 0.0
  %1733 = vmatpush1.msra.mxu0 0.0
  %1734 = vmatprep.subr.mxu0 0.0
  %1735 = vmatpush1.msra.mxu0 0.0
  %1736 = vmatprep.subr.mxu0 0.0
  %1737 = vmatpush1.msra.mxu0 0.0
  %1738 = vmatprep.subr.mxu0 0.0
  %1739 = vmatpush1.msra.mxu0 0.0
  %1740 = vmatprep.subr.mxu0 0.0
  %1741 = vmatpush1.msra.mxu0 0.0
  %1742 = vmatprep.subr.mxu0 0.0
  %1743 = vmatpush1.msra.mxu0 0.0
  %1744 = vmatprep.subr.mxu0 0.0
  %1745 = vmatpush1.msra.mxu0 0.0
  %1746 = vmatprep.subr.mxu0 0.0
  %1747 = vmatpush1.msra.mxu0 0.0
  %1748 = vmatprep.subr.mxu0 0.0
  %1749 = vmatpush1.msra.mxu0 0.0
  %1750 = vmatprep.subr.mxu0 0.0
  %1751 = vmatpush1.msra.mxu0 0.0
  %1752 = vmatprep.subr.mxu0 0.0
  %1753 = vmatpush1.msra.mxu0 0.0
  %1754 = vmatprep.subr.mxu0 0.0
  %1755 = vmatpush1.msra.mxu0 0.0
  %1756 = vmatprep.subr.mxu0 0.0
  %1757 = vmatpush1.msra.mxu0 0.0
  %1758 = vmatprep.subr.mxu0 0.0
  %1759 = vmatpush1.msra.mxu0 0.0
  %1760 = vmatprep.subr.mxu0 0.0
  %1761 = vmatpush1.msra.mxu0 0.0
  %1762 = vmatprep.subr.mxu0 0.0
  %1763 = vmatpush1.msra.mxu0 0.0
  %1764 = vmatprep.subr.mxu0 0.0
  %1765 = vmatpush1.msra.mxu0 0.0
  %1766 = vmatprep.subr.mxu0 0.0
  %1767 = vmatpush1.msra.mxu0 0.0
  %1768 = vmatprep.subr.mxu0 0.0
  %1769 = vmatpush1.msra.mxu0 0.0
  %1770 = vmatprep.subr.mxu0 0.0
  %1771 = vmatpush1.msra.mxu0 0.0
  %1772 = vmatprep.subr.mxu0 0.0
  %1773 = vmatpush1.msra.mxu0 0.0
  %1774 = vmatprep.subr.mxu0 0.0
  %1775 = vmatpush1.msra.mxu0 0.0
  %1776 = vmatprep.subr.mxu0 0.0
  %1777 = vmatpush1.msra.mxu0 0.0
  %1778 = vmatprep.subr.mxu0 0.0
  %1779 = vmatpush1.msra.mxu0 0.0
  %1780 = vmatprep.subr.mxu0 0.0
  %1781 = vmatpush1.msra.mxu0 0.0
  %1782 = vmatprep.subr.mxu0 0.0
  %1783 = vmatpush1.msra.mxu0 0.0
  %1784 = vmatprep.subr.mxu0 0.0
  %1785 = vmatpush1.msra.mxu0 0.0
  %1786 = vmatprep.subr.mxu0 0.0
  %1787 = vmatpush1.msra.mxu0 0.0
  %1788 = vmatprep.mubr.f32.mxu0 0.0
  %1789 = vmatmul.mubr.f32.gmra.mrb[0].mxu0 %v1200
  %v1790 = vpop.f32.mrb[0].mxu0
  %v1791 = vadd.f32 %v1161, %v1790
  %v1792 = vpop.f32.mrb[0].mxu0
  %v1793 = vadd.f32 %v1161, %v1792
  %1794 = vmatprep.mubr.f32.mxu0 0.0
  %1795 = vmatmul.mubr.f32.gmra.mrb[0].mxu0 %v1203
  %v1796 = vpop.f32.mrb[0].mxu0
  %v1797 = vadd.f32 %v1166, %v1796
  %v1798 = vpop.f32.mrb[0].mxu0
  %v1799 = vadd.f32 %v1166, %v1798
  %1800 = vmatprep.mubr.f32.mxu0 0.0
  %1801 = vmatmul.mubr.f32.gmra.mrb[0].mxu0 %v1206
  %v1802 = vpop.f32.mrb[0].mxu0
  %v1803 = vadd.f32 %v1171, %v1802
  %v1804 = vpop.f32.mrb[0].mxu0
  %v1805 = vadd.f32 %v1171, %v1804
  %1806 = vmatprep.mubr.f32.mxu0 0.0
  %1807 = vmatmul.mubr.f32.gmra.mrb[0].mxu0 %v1209
  %v1808 = vpop.f32.mrb[0].mxu0
  %v1809 = vadd.f32 %v1176, %v1808
  %v1810 = vpop.f32.mrb[0].mxu0
  %v1811 = vadd.f32 %v1176, %v1810
  %1812 = vmatprep.mubr.f32.mxu0 0.0
  %1813 = vmatmul.mubr.f32.gmra.mrb[0].mxu0 %v1212
  %v1814 = vpop.f32.mrb[0].mxu0
  %v1815 = vadd.f32 %v1181, %v1814
  %v1816 = vpop.f32.mrb[0].mxu0
  %v1817 = vadd.f32 %v1181, %v1816
  %1818 = vmatprep.mubr.f32.mxu0 0.0
  %1819 = vmatmul.mubr.f32.gmra.mrb[0].mxu0 %v1215
  %v1820 = vpop.f32.mrb[0].mxu0
  %v1821 = vadd.f32 %v1186, %v1820
  %v1822 = vpop.f32.mrb[0].mxu0
  %v1823 = vadd.f32 %v1186, %v1822
  %1824 = vmatprep.mubr.f32.mxu0 0.0
  %1825 = vmatmul.mubr.f32.gmra.mrb[0].mxu0 %v1218
  %v1826 = vpop.f32.mrb[0].mxu0
  %v1827 = vadd.f32 %v1191, %v1826
  %v1828 = vpop.f32.mrb[0].mxu0
  %v1829 = vadd.f32 %v1191, %v1828
  %1830 = vmatprep.mubr.f32.mxu0 0.0
  %1831 = vmatmul.mubr.f32.gmra.mrb[0].mxu0 %v1221
  %v1832 = vpop.f32.mrb[0].mxu0
  %v1833 = vadd.f32 %v1196, %v1832
  %v1834 = vpop.f32.mrb[0].mxu0
  %v1835 = vadd.f32 %v1196, %v1834
  %1836 = vdwg.mxu0
  %1837 = vmatprep.subr.mxu0 %v1097
  %1838 = vmatpush1.msra.mxu0 %v1096
  %1839 = vmatprep.subr.mxu0 %v1113
  %1840 = vmatpush1.msra.mxu0 %v1112
  %1841 = vmatprep.subr.mxu0 %v1129
  %1842 = vmatpush1.msra.mxu0 %v1128
  %1843 = vmatprep.subr.mxu0 %v1258
  %1844 = vmatpush1.msra.mxu0 %v1255
  %1845 = vmatprep.subr.mxu0 0.0
  %1846 = vmatpush1.msra.mxu0 0.0
  %1847 = vmatprep.subr.mxu0 0.0
  %1848 = vmatpush1.msra.mxu0 0.0
  %1849 = vmatprep.subr.mxu0 0.0
  %1850 = vmatpush1.msra.mxu0 0.0
  %1851 = vmatprep.subr.mxu0 0.0
  %1852 = vmatpush1.msra.mxu0 0.0
  %1853 = vmatprep.subr.mxu0 0.0
  %1854 = vmatpush1.msra.mxu0 0.0
  %1855 = vmatprep.subr.mxu0 0.0
  %1856 = vmatpush1.msra.mxu0 0.0
  %1857 = vmatprep.subr.mxu0 0.0
  %1858 = vmatpush1.msra.mxu0 0.0
  %1859 = vmatprep.subr.mxu0 0.0
  %1860 = vmatpush1.msra.mxu0 0.0
  %1861 = vmatprep.subr.mxu0 0.0
  %1862 = vmatpush1.msra.mxu0 0.0
  %1863 = vmatprep.subr.mxu0 0.0
  %1864 = vmatpush1.msra.mxu0 0.0
  %1865 = vmatprep.subr.mxu0 0.0
  %1866 = vmatpush1.msra.mxu0 0.0
  %1867 = vmatprep.subr.mxu0 0.0
  %1868 = vmatpush1.msra.mxu0 0.0
  %1869 = vmatprep.subr.mxu0 0.0
  %1870 = vmatpush1.msra.mxu0 0.0
  %1871 = vmatprep.subr.mxu0 0.0
  %1872 = vmatpush1.msra.mxu0 0.0
  %1873 = vmatprep.subr.mxu0 0.0
  %1874 = vmatpush1.msra.mxu0 0.0
  %1875 = vmatprep.subr.mxu0 0.0
  %1876 = vmatpush1.msra.mxu0 0.0
  %1877 = vmatprep.subr.mxu0 0.0
  %1878 = vmatpush1.msra.mxu0 0.0
  %1879 = vmatprep.subr.mxu0 0.0
  %1880 = vmatpush1.msra.mxu0 0.0
  %1881 = vmatprep.subr.mxu0 0.0
  %1882 = vmatpush1.msra.mxu0 0.0
  %1883 = vmatprep.subr.mxu0 0.0
  %1884 = vmatpush1.msra.mxu0 0.0
  %1885 = vmatprep.subr.mxu0 0.0
  %1886 = vmatpush1.msra.mxu0 0.0
  %1887 = vmatprep.subr.mxu0 0.0
  %1888 = vmatpush1.msra.mxu0 0.0
  %1889 = vmatprep.subr.mxu0 0.0
  %1890 = vmatpush1.msra.mxu0 0.0
  %1891 = vmatprep.subr.mxu0 0.0
  %1892 = vmatpush1.msra.mxu0 0.0
  %1893 = vmatprep.subr.mxu0 0.0
  %1894 = vmatpush1.msra.mxu0 0.0
  %1895 = vmatprep.subr.mxu0 0.0
  %1896 = vmatpush1.msra.mxu0 0.0
  %1897 = vmatprep.subr.mxu0 0.0
  %1898 = vmatpush1.msra.mxu0 0.0
  %1899 = vmatprep.subr.mxu0 0.0
  %1900 = vmatpush1.msra.mxu0 0.0
  %1901 = vmatprep.mubr.f32.mxu0 0.0
  %1902 = vmatmul.mubr.f32.gmra.mrb[0].mxu0 %v1200
  %v1903 = vpop.f32.mrb[0].mxu0
  %v1904 = vadd.f32 %v1161, %v1903
  %v1905 = vpop.f32.mrb[0].mxu0
  %v1906 = vadd.f32 %v1161, %v1905
  %1907 = vmatprep.mubr.f32.mxu0 0.0
  %1908 = vmatmul.mubr.f32.gmra.mrb[0].mxu0 %v1203
  %v1909 = vpop.f32.mrb[0].mxu0
  %v1910 = vadd.f32 %v1166, %v1909
  %v1911 = vpop.f32.mrb[0].mxu0
  %v1912 = vadd.f32 %v1166, %v1911
  %1913 = vmatprep.mubr.f32.mxu0 0.0
  %1914 = vmatmul.mubr.f32.gmra.mrb[0].mxu0 %v1206
  %v1915 = vpop.f32.mrb[0].mxu0
  %v1916 = vadd.f32 %v1171, %v1915
  %v1917 = vpop.f32.mrb[0].mxu0
  %v1918 = vadd.f32 %v1171, %v1917
  %1919 = vmatprep.mubr.f32.mxu0 0.0
  %1920 = vmatmul.mubr.f32.gmra.mrb[0].mxu0 %v1209
  %v1921 = vpop.f32.mrb[0].mxu0
  %v1922 = vadd.f32 %v1176, %v1921
  %v1923 = vpop.f32.mrb[0].mxu0
  %v1924 = vadd.f32 %v1176, %v1923
  %1925 = vmatprep.mubr.f32.mxu0 0.0
  %1926 = vmatmul.mubr.f32.gmra.mrb[0].mxu0 %v1212
  %v1927 = vpop.f32.mrb[0].mxu0
  %v1928 = vadd.f32 %v1181, %v1927
  %v1929 = vpop.f32.mrb[0].mxu0
  %v1930 = vadd.f32 %v1181, %v1929
  %1931 = vmatprep.mubr.f32.mxu0 0.0
  %1932 = vmatmul.mubr.f32.gmra.mrb[0].mxu0 %v1215
  %v1933 = vpop.f32.mrb[0].mxu0
  %v1934 = vadd.f32 %v1186, %v1933
  %v1935 = vpop.f32.mrb[0].mxu0
  %v1936 = vadd.f32 %v1186, %v1935
  %1937 = vmatprep.mubr.f32.mxu0 0.0
  %1938 = vmatmul.mubr.f32.gmra.mrb[0].mxu0 %v1218
  %v1939 = vpop.f32.mrb[0].mxu0
  %v1940 = vadd.f32 %v1191, %v1939
  %v1941 = vpop.f32.mrb[0].mxu0
  %v1942 = vadd.f32 %v1191, %v1941
  %1943 = vmatprep.mubr.f32.mxu0 0.0
  %1944 = vmatmul.mubr.f32.gmra.mrb[0].mxu0 %v1221
  %v1945 = vpop.f32.mrb[0].mxu0
  %v1946 = vadd.f32 %v1196, %v1945
  %v1947 = vpop.f32.mrb[0].mxu0
  %v1948 = vadd.f32 %v1196, %v1947
  %1949 = vdwg.mxu0
  %1950 = vmatprep.subr.mxu0 %v1099
  %1951 = vmatpush1.msra.mxu0 %v1098
  %1952 = vmatprep.subr.mxu0 %v1115
  %1953 = vmatpush1.msra.mxu0 %v1114
  %1954 = vmatprep.subr.mxu0 %v1131
  %1955 = vmatpush1.msra.mxu0 %v1130
  %1956 = vmatprep.subr.mxu0 %v1264
  %1957 = vmatpush1.msra.mxu0 %v1261
  %1958 = vmatprep.subr.mxu0 0.0
  %1959 = vmatpush1.msra.mxu0 0.0
  %1960 = vmatprep.subr.mxu0 0.0
  %1961 = vmatpush1.msra.mxu0 0.0
  %1962 = vmatprep.subr.mxu0 0.0
  %1963 = vmatpush1.msra.mxu0 0.0
  %1964 = vmatprep.subr.mxu0 0.0
  %1965 = vmatpush1.msra.mxu0 0.0
  %1966 = vmatprep.subr.mxu0 0.0
  %1967 = vmatpush1.msra.mxu0 0.0
  %1968 = vmatprep.subr.mxu0 0.0
  %1969 = vmatpush1.msra.mxu0 0.0
  %1970 = vmatprep.subr.mxu0 0.0
  %1971 = vmatpush1.msra.mxu0 0.0
  %1972 = vmatprep.subr.mxu0 0.0
  %1973 = vmatpush1.msra.mxu0 0.0
  %1974 = vmatprep.subr.mxu0 0.0
  %1975 = vmatpush1.msra.mxu0 0.0
  %1976 = vmatprep.subr.mxu0 0.0
  %1977 = vmatpush1.msra.mxu0 0.0
  %1978 = vmatprep.subr.mxu0 0.0
  %1979 = vmatpush1.msra.mxu0 0.0
  %1980 = vmatprep.subr.mxu0 0.0
  %1981 = vmatpush1.msra.mxu0 0.0
  %1982 = vmatprep.subr.mxu0 0.0
  %1983 = vmatpush1.msra.mxu0 0.0
  %1984 = vmatprep.subr.mxu0 0.0
  %1985 = vmatpush1.msra.mxu0 0.0
  %1986 = vmatprep.subr.mxu0 0.0
  %1987 = vmatpush1.msra.mxu0 0.0
  %1988 = vmatprep.subr.mxu0 0.0
  %1989 = vmatpush1.msra.mxu0 0.0
  %1990 = vmatprep.subr.mxu0 0.0
  %1991 = vmatpush1.msra.mxu0 0.0
  %1992 = vmatprep.subr.mxu0 0.0
  %1993 = vmatpush1.msra.mxu0 0.0
  %1994 = vmatprep.subr.mxu0 0.0
  %1995 = vmatpush1.msra.mxu0 0.0
  %1996 = vmatprep.subr.mxu0 0.0
  %1997 = vmatpush1.msra.mxu0 0.0
  %1998 = vmatprep.subr.mxu0 0.0
  %1999 = vmatpush1.msra.mxu0 0.0
  %2000 = vmatprep.subr.mxu0 0.0
  %2001 = vmatpush1.msra.mxu0 0.0
  %2002 = vmatprep.subr.mxu0 0.0
  %2003 = vmatpush1.msra.mxu0 0.0
  %2004 = vmatprep.subr.mxu0 0.0
  %2005 = vmatpush1.msra.mxu0 0.0
  %2006 = vmatprep.subr.mxu0 0.0
  %2007 = vmatpush1.msra.mxu0 0.0
  %2008 = vmatprep.subr.mxu0 0.0
  %2009 = vmatpush1.msra.mxu0 0.0
  %2010 = vmatprep.subr.mxu0 0.0
  %2011 = vmatpush1.msra.mxu0 0.0
  %2012 = vmatprep.subr.mxu0 0.0
  %2013 = vmatpush1.msra.mxu0 0.0
  %2014 = vmatprep.mubr.f32.mxu0 0.0
  %2015 = vmatmul.mubr.f32.gmra.mrb[0].mxu0 %v1200
  %v2016 = vpop.f32.mrb[0].mxu0
  %v2017 = vadd.f32 %v1161, %v2016
  %v2018 = vpop.f32.mrb[0].mxu0
  %v2019 = vadd.f32 %v1161, %v2018
  %2020 = vmatprep.mubr.f32.mxu0 0.0
  %2021 = vmatmul.mubr.f32.gmra.mrb[0].mxu0 %v1203
  %v2022 = vpop.f32.mrb[0].mxu0
  %v2023 = vadd.f32 %v1166, %v2022
  %v2024 = vpop.f32.mrb[0].mxu0
  %v2025 = vadd.f32 %v1166, %v2024
  %2026 = vmatprep.mubr.f32.mxu0 0.0
  %2027 = vmatmul.mubr.f32.gmra.mrb[0].mxu0 %v1206
  %v2028 = vpop.f32.mrb[0].mxu0
  %v2029 = vadd.f32 %v1171, %v2028
  %v2030 = vpop.f32.mrb[0].mxu0
  %v2031 = vadd.f32 %v1171, %v2030
  %2032 = vmatprep.mubr.f32.mxu0 0.0
  %2033 = vmatmul.mubr.f32.gmra.mrb[0].mxu0 %v1209
  %v2034 = vpop.f32.mrb[0].mxu0
  %v2035 = vadd.f32 %v1176, %v2034
  %v2036 = vpop.f32.mrb[0].mxu0
  %v2037 = vadd.f32 %v1176, %v2036
  %2038 = vmatprep.mubr.f32.mxu0 0.0
  %2039 = vmatmul.mubr.f32.gmra.mrb[0].mxu0 %v1212
  %v2040 = vpop.f32.mrb[0].mxu0
  %v2041 = vadd.f32 %v1181, %v2040
  %v2042 = vpop.f32.mrb[0].mxu0
  %v2043 = vadd.f32 %v1181, %v2042
  %2044 = vmatprep.mubr.f32.mxu0 0.0
  %2045 = vmatmul.mubr.f32.gmra.mrb[0].mxu0 %v1215
  %v2046 = vpop.f32.mrb[0].mxu0
  %v2047 = vadd.f32 %v1186, %v2046
  %v2048 = vpop.f32.mrb[0].mxu0
  %v2049 = vadd.f32 %v1186, %v2048
  %2050 = vmatprep.mubr.f32.mxu0 0.0
  %2051 = vmatmul.mubr.f32.gmra.mrb[0].mxu0 %v1218
  %v2052 = vpop.f32.mrb[0].mxu0
  %v2053 = vadd.f32 %v1191, %v2052
  %v2054 = vpop.f32.mrb[0].mxu0
  %v2055 = vadd.f32 %v1191, %v2054
  %2056 = vmatprep.mubr.f32.mxu0 0.0
  %2057 = vmatmul.mubr.f32.gmra.mrb[0].mxu0 %v1221
  %v2058 = vpop.f32.mrb[0].mxu0
  %v2059 = vadd.f32 %v1196, %v2058
  %v2060 = vpop.f32.mrb[0].mxu0
  %v2061 = vadd.f32 %v1196, %v2060
  %2062 = vdwg.mxu0
  %2063 = vmatprep.subr.mxu0 %v1101
  %2064 = vmatpush1.msra.mxu0 %v1100
  %2065 = vmatprep.subr.mxu0 %v1117
  %2066 = vmatpush1.msra.mxu0 %v1116
  %2067 = vmatprep.subr.mxu0 %v1133
  %2068 = vmatpush1.msra.mxu0 %v1132
  %2069 = vmatprep.subr.mxu0 %v1270
  %2070 = vmatpush1.msra.mxu0 %v1267
  %2071 = vmatprep.subr.mxu0 0.0
  %2072 = vmatpush1.msra.mxu0 0.0
  %2073 = vmatprep.subr.mxu0 0.0
  %2074 = vmatpush1.msra.mxu0 0.0
  %2075 = vmatprep.subr.mxu0 0.0
  %2076 = vmatpush1.msra.mxu0 0.0
  %2077 = vmatprep.subr.mxu0 0.0
  %2078 = vmatpush1.msra.mxu0 0.0
  %2079 = vmatprep.subr.mxu0 0.0
  %2080 = vmatpush1.msra.mxu0 0.0
  %2081 = vmatprep.subr.mxu0 0.0
  %2082 = vmatpush1.msra.mxu0 0.0
  %2083 = vmatprep.subr.mxu0 0.0
  %2084 = vmatpush1.msra.mxu0 0.0
  %2085 = vmatprep.subr.mxu0 0.0
  %2086 = vmatpush1.msra.mxu0 0.0
  %2087 = vmatprep.subr.mxu0 0.0
  %2088 = vmatpush1.msra.mxu0 0.0
  %2089 = vmatprep.subr.mxu0 0.0
  %2090 = vmatpush1.msra.mxu0 0.0
  %2091 = vmatprep.subr.mxu0 0.0
  %2092 = vmatpush1.msra.mxu0 0.0
  %2093 = vmatprep.subr.mxu0 0.0
  %2094 = vmatpush1.msra.mxu0 0.0
  %2095 = vmatprep.subr.mxu0 0.0
  %2096 = vmatpush1.msra.mxu0 0.0
  %2097 = vmatprep.subr.mxu0 0.0
  %2098 = vmatpush1.msra.mxu0 0.0
  %2099 = vmatprep.subr.mxu0 0.0
  %2100 = vmatpush1.msra.mxu0 0.0
  %2101 = vmatprep.subr.mxu0 0.0
  %2102 = vmatpush1.msra.mxu0 0.0
  %2103 = vmatprep.subr.mxu0 0.0
  %2104 = vmatpush1.msra.mxu0 0.0
  %2105 = vmatprep.subr.mxu0 0.0
  %2106 = vmatpush1.msra.mxu0 0.0
  %2107 = vmatprep.subr.mxu0 0.0
  %2108 = vmatpush1.msra.mxu0 0.0
  %2109 = vmatprep.subr.mxu0 0.0
  %2110 = vmatpush1.msra.mxu0 0.0
  %2111 = vmatprep.subr.mxu0 0.0
  %2112 = vmatpush1.msra.mxu0 0.0
  %2113 = vmatprep.subr.mxu0 0.0
  %2114 = vmatpush1.msra.mxu0 0.0
  %2115 = vmatprep.subr.mxu0 0.0
  %2116 = vmatpush1.msra.mxu0 0.0
  %2117 = vmatprep.subr.mxu0 0.0
  %2118 = vmatpush1.msra.mxu0 0.0
  %2119 = vmatprep.subr.mxu0 0.0
  %2120 = vmatpush1.msra.mxu0 0.0
  %2121 = vmatprep.subr.mxu0 0.0
  %2122 = vmatpush1.msra.mxu0 0.0
  %2123 = vmatprep.subr.mxu0 0.0
  %2124 = vmatpush1.msra.mxu0 0.0
  %2125 = vmatprep.subr.mxu0 0.0
  %2126 = vmatpush1.msra.mxu0 0.0
  %2127 = vmatprep.mubr.f32.mxu0 0.0
  %2128 = vmatmul.mubr.f32.gmra.mrb[0].mxu0 %v1200
  %v2129 = vpop.f32.mrb[0].mxu0
  %v2130 = vadd.f32 %v1161, %v2129
  %v2131 = vpop.f32.mrb[0].mxu0
  %v2132 = vadd.f32 %v1161, %v2131
  %2133 = vmatprep.mubr.f32.mxu0 0.0
  %2134 = vmatmul.mubr.f32.gmra.mrb[0].mxu0 %v1203
  %v2135 = vpop.f32.mrb[0].mxu0
  %v2136 = vadd.f32 %v1166, %v2135
  %v2137 = vpop.f32.mrb[0].mxu0
  %v2138 = vadd.f32 %v1166, %v2137
  %2139 = vmatprep.mubr.f32.mxu0 0.0
  %2140 = vmatmul.mubr.f32.gmra.mrb[0].mxu0 %v1206
  %v2141 = vpop.f32.mrb[0].mxu0
  %v2142 = vadd.f32 %v1171, %v2141
  %v2143 = vpop.f32.mrb[0].mxu0
  %v2144 = vadd.f32 %v1171, %v2143
  %2145 = vmatprep.mubr.f32.mxu0 0.0
  %2146 = vmatmul.mubr.f32.gmra.mrb[0].mxu0 %v1209
  %v2147 = vpop.f32.mrb[0].mxu0
  %v2148 = vadd.f32 %v1176, %v2147
  %v2149 = vpop.f32.mrb[0].mxu0
  %v2150 = vadd.f32 %v1176, %v2149
  %2151 = vmatprep.mubr.f32.mxu0 0.0
  %2152 = vmatmul.mubr.f32.gmra.mrb[0].mxu0 %v1212
  %v2153 = vpop.f32.mrb[0].mxu0
  %v2154 = vadd.f32 %v1181, %v2153
  %v2155 = vpop.f32.mrb[0].mxu0
  %v2156 = vadd.f32 %v1181, %v2155
  %2157 = vmatprep.mubr.f32.mxu0 0.0
  %2158 = vmatmul.mubr.f32.gmra.mrb[0].mxu0 %v1215
  %v2159 = vpop.f32.mrb[0].mxu0
  %v2160 = vadd.f32 %v1186, %v2159
  %v2161 = vpop.f32.mrb[0].mxu0
  %v2162 = vadd.f32 %v1186, %v2161
  %2163 = vmatprep.mubr.f32.mxu0 0.0
  %2164 = vmatmul.mubr.f32.gmra.mrb[0].mxu0 %v1218
  %v2165 = vpop.f32.mrb[0].mxu0
  %v2166 = vadd.f32 %v1191, %v2165
  %v2167 = vpop.f32.mrb[0].mxu0
  %v2168 = vadd.f32 %v1191, %v2167
  %2169 = vmatprep.mubr.f32.mxu0 0.0
  %2170 = vmatmul.mubr.f32.gmra.mrb[0].mxu0 %v1221
  %v2171 = vpop.f32.mrb[0].mxu0
  %v2172 = vadd.f32 %v1196, %v2171
  %v2173 = vpop.f32.mrb[0].mxu0
  %v2174 = vadd.f32 %v1196, %v2173
  %2175 = vdwg.mxu0
  %v2176 = vmax.f32 %v1339, 0.0
  %v2177 = vmax.f32 %v1341, 0.0
  %v2178 = vmax.f32 %v1452, 0.0
  %v2179 = vmax.f32 %v1454, 0.0
  %v2180 = vmax.f32 %v1565, 0.0
  %v2181 = vmax.f32 %v1567, 0.0
  %v2182 = vmax.f32 %v1678, 0.0
  %v2183 = vmax.f32 %v1680, 0.0
  %v2184 = vmax.f32 %v1791, 0.0
  %v2185 = vmax.f32 %v1793, 0.0
  %v2186 = vmax.f32 %v1904, 0.0
  %v2187 = vmax.f32 %v1906, 0.0
  %v2188 = vmax.f32 %v2017, 0.0
  %v2189 = vmax.f32 %v2019, 0.0
  %v2190 = vmax.f32 %v2130, 0.0
  %v2191 = vmax.f32 %v2132, 0.0
  %v2192 = vmax.f32 %v1345, 0.0
  %v2193 = vmax.f32 %v1347, 0.0
  %v2194 = vmax.f32 %v1458, 0.0
  %v2195 = vmax.f32 %v1460, 0.0
  %v2196 = vmax.f32 %v1571, 0.0
  %v2197 = vmax.f32 %v1573, 0.0
  %v2198 = vmax.f32 %v1684, 0.0
  %v2199 = vmax.f32 %v1686, 0.0
  %v2200 = vmax.f32 %v1797, 0.0
  %v2201 = vmax.f32 %v1799, 0.0
  %v2202 = vmax.f32 %v1910, 0.0
  %v2203 = vmax.f32 %v1912, 0.0
  %v2204 = vmax.f32 %v2023, 0.0
  %v2205 = vmax.f32 %v2025, 0.0
  %v2206 = vmax.f32 %v2136, 0.0
  %v2207 = vmax.f32 %v2138, 0.0
  %v2208 = vmax.f32 %v1351, 0.0
  %v2209 = vmax.f32 %v1353, 0.0
  %v2210 = vmax.f32 %v1464, 0.0
  %v2211 = vmax.f32 %v1466, 0.0
  %v2212 = vmax.f32 %v1577, 0.0
  %v2213 = vmax.f32 %v1579, 0.0
  %v2214 = vmax.f32 %v1690, 0.0
  %v2215 = vmax.f32 %v1692, 0.0
  %v2216 = vmax.f32 %v1803, 0.0
  %v2217 = vmax.f32 %v1805, 0.0
  %v2218 = vmax.f32 %v1916, 0.0
  %v2219 = vmax.f32 %v1918, 0.0
  %v2220 = vmax.f32 %v2029, 0.0
  %v2221 = vmax.f32 %v2031, 0.0
  %v2222 = vmax.f32 %v2142, 0.0
  %v2223 = vmax.f32 %v2144, 0.0
  %v2224 = vmax.f32 %v1357, 0.0
  %v2225 = vmax.f32 %v1359, 0.0
  %v2226 = vmax.f32 %v1470, 0.0
  %v2227 = vmax.f32 %v1472, 0.0
  %v2228 = vmax.f32 %v1583, 0.0
  %v2229 = vmax.f32 %v1585, 0.0
  %v2230 = vmax.f32 %v1696, 0.0
  %v2231 = vmax.f32 %v1698, 0.0
  %v2232 = vmax.f32 %v1809, 0.0
  %v2233 = vmax.f32 %v1811, 0.0
  %v2234 = vmax.f32 %v1922, 0.0
  %v2235 = vmax.f32 %v1924, 0.0
  %v2236 = vmax.f32 %v2035, 0.0
  %v2237 = vmax.f32 %v2037, 0.0
  %v2238 = vmax.f32 %v2148, 0.0
  %v2239 = vmax.f32 %v2150, 0.0
  %v2240 = vmax.f32 %v1363, 0.0
  %v2241 = vmax.f32 %v1365, 0.0
  %v2242 = vmax.f32 %v1476, 0.0
  %v2243 = vmax.f32 %v1478, 0.0
  %v2244 = vmax.f32 %v1589, 0.0
  %v2245 = vmax.f32 %v1591, 0.0
  %v2246 = vmax.f32 %v1702, 0.0
  %v2247 = vmax.f32 %v1704, 0.0
  %v2248 = vmax.f32 %v1815, 0.0
  %v2249 = vmax.f32 %v1817, 0.0
  %v2250 = vmax.f32 %v1928, 0.0
  %v2251 = vmax.f32 %v1930, 0.0
  %v2252 = vmax.f32 %v2041, 0.0
  %v2253 = vmax.f32 %v2043, 0.0
  %v2254 = vmax.f32 %v2154, 0.0
  %v2255 = vmax.f32 %v2156, 0.0
  %v2256 = vmax.f32 %v1369, 0.0
  %v2257 = vmax.f32 %v1371, 0.0
  %v2258 = vmax.f32 %v1482, 0.0
  %v2259 = vmax.f32 %v1484, 0.0
  %v2260 = vmax.f32 %v1595, 0.0
  %v2261 = vmax.f32 %v1597, 0.0
  %v2262 = vmax.f32 %v1708, 0.0
  %v2263 = vmax.f32 %v1710, 0.0
  %v2264 = vmax.f32 %v1821, 0.0
  %v2265 = vmax.f32 %v1823, 0.0
  %v2266 = vmax.f32 %v1934, 0.0
  %v2267 = vmax.f32 %v1936, 0.0
  %v2268 = vmax.f32 %v2047, 0.0
  %v2269 = vmax.f32 %v2049, 0.0
  %v2270 = vmax.f32 %v2160, 0.0
  %v2271 = vmax.f32 %v2162, 0.0
  %v2272 = vmax.f32 %v1375, 0.0
  %v2273 = vmax.f32 %v1377, 0.0
  %v2274 = vmax.f32 %v1488, 0.0
  %v2275 = vmax.f32 %v1490, 0.0
  %v2276 = vmax.f32 %v1601, 0.0
  %v2277 = vmax.f32 %v1603, 0.0
  %v2278 = vmax.f32 %v1714, 0.0
  %v2279 = vmax.f32 %v1716, 0.0
  %v2280 = vmax.f32 %v1827, 0.0
  %v2281 = vmax.f32 %v1829, 0.0
  %v2282 = vmax.f32 %v1940, 0.0
  %v2283 = vmax.f32 %v1942, 0.0
  %v2284 = vmax.f32 %v2053, 0.0
  %v2285 = vmax.f32 %v2055, 0.0
  %v2286 = vmax.f32 %v2166, 0.0
  %v2287 = vmax.f32 %v2168, 0.0
  %v2288 = vmax.f32 %v1381, 0.0
  %v2289 = vmax.f32 %v1383, 0.0
  %v2290 = vmax.f32 %v1494, 0.0
  %v2291 = vmax.f32 %v1496, 0.0
  %v2292 = vmax.f32 %v1607, 0.0
  %v2293 = vmax.f32 %v1609, 0.0
  %v2294 = vmax.f32 %v1720, 0.0
  %v2295 = vmax.f32 %v1722, 0.0
  %v2296 = vmax.f32 %v1833, 0.0
  %v2297 = vmax.f32 %v1835, 0.0
  %v2298 = vmax.f32 %v1946, 0.0
  %v2299 = vmax.f32 %v1948, 0.0
  %v2300 = vmax.f32 %v2059, 0.0
  %v2301 = vmax.f32 %v2061, 0.0
  %v2302 = vmax.f32 %v2172, 0.0
  %v2303 = vmax.f32 %v2174, 0.0
  %v2304 = vld [vmem:[%s3] sm:$0xff]
  %v2305 = vld [vmem:[%s3 + $0x8] sm:$0xff]
  %v2308 = vlaneseq
  %v2309 = vshrl.u32 %v2308, 7
  %v2310 = vsub.s32 0, %v2309
  %v2311 = vrot.slane %v2304, %v2310
  %v2312 = vlaneseq
  %v2313 = vshrl.u32 %v2312, 7
  %v2314 = vsub.s32 1, %v2313
  %v2315 = vrot.slane %v2304, %v2314
  %v2316 = vlaneseq
  %v2317 = vshrl.u32 %v2316, 7
  %v2318 = vsub.s32 2, %v2317
  %v2319 = vrot.slane %v2304, %v2318
  %v2320 = vlaneseq
  %v2321 = vshrl.u32 %v2320, 7
  %v2322 = vsub.s32 3, %v2321
  %v2323 = vrot.slane %v2304, %v2322
  %v2324 = vlaneseq
  %v2325 = vshrl.u32 %v2324, 7
  %v2326 = vsub.s32 4, %v2325
  %v2327 = vrot.slane %v2304, %v2326
  %v2328 = vlaneseq
  %v2329 = vshrl.u32 %v2328, 7
  %v2330 = vsub.s32 5, %v2329
  %v2331 = vrot.slane %v2304, %v2330
  %v2332 = vlaneseq
  %v2333 = vshrl.u32 %v2332, 7
  %v2334 = vsub.s32 6, %v2333
  %v2335 = vrot.slane %v2304, %v2334
  %v2336 = vlaneseq
  %v2337 = vshrl.u32 %v2336, 7
  %v2338 = vsub.s32 7, %v2337
  %v2339 = vrot.slane %v2304, %v2338
  %v2340 = vlaneseq
  %v2341 = vshrl.u32 %v2340, 7
  %v2342 = vsub.s32 0, %v2341
  %v2343 = vrot.slane %v2305, %v2342
  %v2344 = vlaneseq
  %v2345 = vshrl.u32 %v2344, 7
  %v2346 = vsub.s32 1, %v2345
  %v2347 = vrot.slane %v2305, %v2346
  %v2348 = vlaneseq
  %v2349 = vshrl.u32 %v2348, 7
  %v2350 = vsub.s32 2, %v2349
  %v2351 = vrot.slane %v2305, %v2350
  %v2352 = vlaneseq
  %v2353 = vshrl.u32 %v2352, 7
  %v2354 = vsub.s32 3, %v2353
  %v2355 = vrot.slane %v2305, %v2354
  %v2356 = vlaneseq
  %v2357 = vshrl.u32 %v2356, 7
  %v2358 = vsub.s32 4, %v2357
  %v2359 = vrot.slane %v2305, %v2358
  %v2360 = vlaneseq
  %v2361 = vshrl.u32 %v2360, 7
  %v2362 = vsub.s32 5, %v2361
  %v2363 = vrot.slane %v2305, %v2362
  %v2364 = vlaneseq
  %v2365 = vshrl.u32 %v2364, 7
  %v2366 = vsub.s32 6, %v2365
  %v2367 = vrot.slane %v2305, %v2366
  %v2368 = vlaneseq
  %v2369 = vshrl.u32 %v2368, 7
  %v2370 = vsub.s32 7, %v2369
  %v2371 = vrot.slane %v2305, %v2370
  %v2388 = vmul.f32 %v2176, %v2311
  %v2389 = vmul.f32 %v2177, %v2315
  %v2390 = vmul.f32 %v2178, %v2319
  %v2391 = vmul.f32 %v2179, %v2323
  %v2392 = vmul.f32 %v2180, %v2327
  %v2393 = vmul.f32 %v2181, %v2331
  %v2394 = vmul.f32 %v2182, %v2335
  %v2395 = vmul.f32 %v2183, %v2339
  %v2396 = vmul.f32 %v2184, %v2343
  %v2397 = vmul.f32 %v2185, %v2347
  %v2398 = vmul.f32 %v2186, %v2351
  %v2399 = vmul.f32 %v2187, %v2355
  %v2400 = vmul.f32 %v2188, %v2359
  %v2401 = vmul.f32 %v2189, %v2363
  %v2402 = vmul.f32 %v2190, %v2367
  %v2403 = vmul.f32 %v2191, %v2371
  %v2404 = vmul.f32 %v2192, %v2311
  %v2405 = vmul.f32 %v2193, %v2315
  %v2406 = vmul.f32 %v2194, %v2319
  %v2407 = vmul.f32 %v2195, %v2323
  %v2408 = vmul.f32 %v2196, %v2327
  %v2409 = vmul.f32 %v2197, %v2331
  %v2410 = vmul.f32 %v2198, %v2335
  %v2411 = vmul.f32 %v2199, %v2339
  %v2412 = vmul.f32 %v2200, %v2343
  %v2413 = vmul.f32 %v2201, %v2347
  %v2414 = vmul.f32 %v2202, %v2351
  %v2415 = vmul.f32 %v2203, %v2355
  %v2416 = vmul.f32 %v2204, %v2359
  %v2417 = vmul.f32 %v2205, %v2363
  %v2418 = vmul.f32 %v2206, %v2367
  %v2419 = vmul.f32 %v2207, %v2371
  %v2420 = vmul.f32 %v2208, %v2311
  %v2421 = vmul.f32 %v2209, %v2315
  %v2422 = vmul.f32 %v2210, %v2319
  %v2423 = vmul.f32 %v2211, %v2323
  %v2424 = vmul.f32 %v2212, %v2327
  %v2425 = vmul.f32 %v2213, %v2331
  %v2426 = vmul.f32 %v2214, %v2335
  %v2427 = vmul.f32 %v2215, %v2339
  %v2428 = vmul.f32 %v2216, %v2343
  %v2429 = vmul.f32 %v2217, %v2347
  %v2430 = vmul.f32 %v2218, %v2351
  %v2431 = vmul.f32 %v2219, %v2355
  %v2432 = vmul.f32 %v2220, %v2359
  %v2433 = vmul.f32 %v2221, %v2363
  %v2434 = vmul.f32 %v2222, %v2367
  %v2435 = vmul.f32 %v2223, %v2371
  %v2436 = vmul.f32 %v2224, %v2311
  %v2437 = vmul.f32 %v2225, %v2315
  %v2438 = vmul.f32 %v2226, %v2319
  %v2439 = vmul.f32 %v2227, %v2323
  %v2440 = vmul.f32 %v2228, %v2327
  %v2441 = vmul.f32 %v2229, %v2331
  %v2442 = vmul.f32 %v2230, %v2335
  %v2443 = vmul.f32 %v2231, %v2339
  %v2444 = vmul.f32 %v2232, %v2343
  %v2445 = vmul.f32 %v2233, %v2347
  %v2446 = vmul.f32 %v2234, %v2351
  %v2447 = vmul.f32 %v2235, %v2355
  %v2448 = vmul.f32 %v2236, %v2359
  %v2449 = vmul.f32 %v2237, %v2363
  %v2450 = vmul.f32 %v2238, %v2367
  %v2451 = vmul.f32 %v2239, %v2371
  %v2452 = vmul.f32 %v2240, %v2311
  %v2453 = vmul.f32 %v2241, %v2315
  %v2454 = vmul.f32 %v2242, %v2319
  %v2455 = vmul.f32 %v2243, %v2323
  %v2456 = vmul.f32 %v2244, %v2327
  %v2457 = vmul.f32 %v2245, %v2331
  %v2458 = vmul.f32 %v2246, %v2335
  %v2459 = vmul.f32 %v2247, %v2339
  %v2460 = vmul.f32 %v2248, %v2343
  %v2461 = vmul.f32 %v2249, %v2347
  %v2462 = vmul.f32 %v2250, %v2351
  %v2463 = vmul.f32 %v2251, %v2355
  %v2464 = vmul.f32 %v2252, %v2359
  %v2465 = vmul.f32 %v2253, %v2363
  %v2466 = vmul.f32 %v2254, %v2367
  %v2467 = vmul.f32 %v2255, %v2371
  %v2468 = vmul.f32 %v2256, %v2311
  %v2469 = vmul.f32 %v2257, %v2315
  %v2470 = vmul.f32 %v2258, %v2319
  %v2471 = vmul.f32 %v2259, %v2323
  %v2472 = vmul.f32 %v2260, %v2327
  %v2473 = vmul.f32 %v2261, %v2331
  %v2474 = vmul.f32 %v2262, %v2335
  %v2475 = vmul.f32 %v2263, %v2339
  %v2476 = vmul.f32 %v2264, %v2343
  %v2477 = vmul.f32 %v2265, %v2347
  %v2478 = vmul.f32 %v2266, %v2351
  %v2479 = vmul.f32 %v2267, %v2355
  %v2480 = vmul.f32 %v2268, %v2359
  %v2481 = vmul.f32 %v2269, %v2363
  %v2482 = vmul.f32 %v2270, %v2367
  %v2483 = vmul.f32 %v2271, %v2371
  %v2484 = vmul.f32 %v2272, %v2311
  %v2485 = vmul.f32 %v2273, %v2315
  %v2486 = vmul.f32 %v2274, %v2319
  %v2487 = vmul.f32 %v2275, %v2323
  %v2488 = vmul.f32 %v2276, %v2327
  %v2489 = vmul.f32 %v2277, %v2331
  %v2490 = vmul.f32 %v2278, %v2335
  %v2491 = vmul.f32 %v2279, %v2339
  %v2492 = vmul.f32 %v2280, %v2343
  %v2493 = vmul.f32 %v2281, %v2347
  %v2494 = vmul.f32 %v2282, %v2351
  %v2495 = vmul.f32 %v2283, %v2355
  %v2496 = vmul.f32 %v2284, %v2359
  %v2497 = vmul.f32 %v2285, %v2363
  %v2498 = vmul.f32 %v2286, %v2367
  %v2499 = vmul.f32 %v2287, %v2371
  %v2500 = vmul.f32 %v2288, %v2311
  %v2501 = vmul.f32 %v2289, %v2315
  %v2502 = vmul.f32 %v2290, %v2319
  %v2503 = vmul.f32 %v2291, %v2323
  %v2504 = vmul.f32 %v2292, %v2327
  %v2505 = vmul.f32 %v2293, %v2331
  %v2506 = vmul.f32 %v2294, %v2335
  %v2507 = vmul.f32 %v2295, %v2339
  %v2508 = vmul.f32 %v2296, %v2343
  %v2509 = vmul.f32 %v2297, %v2347
  %v2510 = vmul.f32 %v2298, %v2351
  %v2511 = vmul.f32 %v2299, %v2355
  %v2512 = vmul.f32 %v2300, %v2359
  %v2513 = vmul.f32 %v2301, %v2363
  %v2514 = vmul.f32 %v2302, %v2367
  %v2515 = vmul.f32 %v2303, %v2371
  %v2516 = vadd.f32 %v2388, %v2389
  %2517 = vadd.xlane.f32.xlu0 %v2516
  %v2518 = vpop.xlane.xlu0 %2517
  %v2519 = vadd.f32 %v2404, %v2405
  %2520 = vadd.xlane.f32.xlu0 %v2519
  %v2521 = vpop.xlane.xlu0 %2520
  %v2522 = vadd.f32 %v2420, %v2421
  %2523 = vadd.xlane.f32.xlu0 %v2522
  %v2524 = vpop.xlane.xlu0 %2523
  %v2525 = vadd.f32 %v2436, %v2437
  %2526 = vadd.xlane.f32.xlu0 %v2525
  %v2527 = vpop.xlane.xlu0 %2526
  %v2528 = vadd.f32 %v2452, %v2453
  %2529 = vadd.xlane.f32.xlu0 %v2528
  %v2530 = vpop.xlane.xlu0 %2529
  %v2531 = vadd.f32 %v2468, %v2469
  %2532 = vadd.xlane.f32.xlu0 %v2531
  %v2533 = vpop.xlane.xlu0 %2532
  %v2534 = vadd.f32 %v2484, %v2485
  %2535 = vadd.xlane.f32.xlu0 %v2534
  %v2536 = vpop.xlane.xlu0 %2535
  %v2537 = vadd.f32 %v2500, %v2501
  %2538 = vadd.xlane.f32.xlu0 %v2537
  %v2539 = vpop.xlane.xlu0 %2538
  %v2540 = vadd.f32 %v2390, %v2391
  %2541 = vadd.xlane.f32.xlu0 %v2540
  %v2542 = vpop.xlane.xlu0 %2541
  %v2543 = vadd.f32 %v2406, %v2407
  %2544 = vadd.xlane.f32.xlu0 %v2543
  %v2545 = vpop.xlane.xlu0 %2544
  %v2546 = vadd.f32 %v2422, %v2423
  %2547 = vadd.xlane.f32.xlu0 %v2546
  %v2548 = vpop.xlane.xlu0 %2547
  %v2549 = vadd.f32 %v2438, %v2439
  %2550 = vadd.xlane.f32.xlu0 %v2549
  %v2551 = vpop.xlane.xlu0 %2550
  %v2552 = vadd.f32 %v2454, %v2455
  %2553 = vadd.xlane.f32.xlu0 %v2552
  %v2554 = vpop.xlane.xlu0 %2553
  %v2555 = vadd.f32 %v2470, %v2471
  %2556 = vadd.xlane.f32.xlu0 %v2555
  %v2557 = vpop.xlane.xlu0 %2556
  %v2558 = vadd.f32 %v2486, %v2487
  %2559 = vadd.xlane.f32.xlu0 %v2558
  %v2560 = vpop.xlane.xlu0 %2559
  %v2561 = vadd.f32 %v2502, %v2503
  %2562 = vadd.xlane.f32.xlu0 %v2561
  %v2563 = vpop.xlane.xlu0 %2562
  %v2564 = vadd.f32 %v2392, %v2393
  %2565 = vadd.xlane.f32.xlu0 %v2564
  %v2566 = vpop.xlane.xlu0 %2565
  %v2567 = vadd.f32 %v2408, %v2409
  %2568 = vadd.xlane.f32.xlu0 %v2567
  %v2569 = vpop.xlane.xlu0 %2568
  %v2570 = vadd.f32 %v2424, %v2425
  %2571 = vadd.xlane.f32.xlu0 %v2570
  %v2572 = vpop.xlane.xlu0 %2571
  %v2573 = vadd.f32 %v2440, %v2441
  %2574 = vadd.xlane.f32.xlu0 %v2573
  %v2575 = vpop.xlane.xlu0 %2574
  %v2576 = vadd.f32 %v2456, %v2457
  %2577 = vadd.xlane.f32.xlu0 %v2576
  %v2578 = vpop.xlane.xlu0 %2577
  %v2579 = vadd.f32 %v2472, %v2473
  %2580 = vadd.xlane.f32.xlu0 %v2579
  %v2581 = vpop.xlane.xlu0 %2580
  %v2582 = vadd.f32 %v2488, %v2489
  %2583 = vadd.xlane.f32.xlu0 %v2582
  %v2584 = vpop.xlane.xlu0 %2583
  %v2585 = vadd.f32 %v2504, %v2505
  %2586 = vadd.xlane.f32.xlu0 %v2585
  %v2587 = vpop.xlane.xlu0 %2586
  %v2588 = vadd.f32 %v2394, %v2395
  %2589 = vadd.xlane.f32.xlu0 %v2588
  %v2590 = vpop.xlane.xlu0 %2589
  %v2591 = vadd.f32 %v2410, %v2411
  %2592 = vadd.xlane.f32.xlu0 %v2591
  %v2593 = vpop.xlane.xlu0 %2592
  %v2594 = vadd.f32 %v2426, %v2427
  %2595 = vadd.xlane.f32.xlu0 %v2594
  %v2596 = vpop.xlane.xlu0 %2595
  %v2597 = vadd.f32 %v2442, %v2443
  %2598 = vadd.xlane.f32.xlu0 %v2597
  %v2599 = vpop.xlane.xlu0 %2598
  %v2600 = vadd.f32 %v2458, %v2459
  %2601 = vadd.xlane.f32.xlu0 %v2600
  %v2602 = vpop.xlane.xlu0 %2601
  %v2603 = vadd.f32 %v2474, %v2475
  %2604 = vadd.xlane.f32.xlu0 %v2603
  %v2605 = vpop.xlane.xlu0 %2604
  %v2606 = vadd.f32 %v2490, %v2491
  %2607 = vadd.xlane.f32.xlu0 %v2606
  %v2608 = vpop.xlane.xlu0 %2607
  %v2609 = vadd.f32 %v2506, %v2507
  %2610 = vadd.xlane.f32.xlu0 %v2609
  %v2611 = vpop.xlane.xlu0 %2610
  %v2612 = vadd.f32 %v2396, %v2397
  %2613 = vadd.xlane.f32.xlu0 %v2612
  %v2614 = vpop.xlane.xlu0 %2613
  %v2615 = vadd.f32 %v2412, %v2413
  %2616 = vadd.xlane.f32.xlu0 %v2615
  %v2617 = vpop.xlane.xlu0 %2616
  %v2618 = vadd.f32 %v2428, %v2429
  %2619 = vadd.xlane.f32.xlu0 %v2618
  %v2620 = vpop.xlane.xlu0 %2619
  %v2621 = vadd.f32 %v2444, %v2445
  %2622 = vadd.xlane.f32.xlu0 %v2621
  %v2623 = vpop.xlane.xlu0 %2622
  %v2624 = vadd.f32 %v2460, %v2461
  %2625 = vadd.xlane.f32.xlu0 %v2624
  %v2626 = vpop.xlane.xlu0 %2625
  %v2627 = vadd.f32 %v2476, %v2477
  %2628 = vadd.xlane.f32.xlu0 %v2627
  %v2629 = vpop.xlane.xlu0 %2628
  %v2630 = vadd.f32 %v2492, %v2493
  %2631 = vadd.xlane.f32.xlu0 %v2630
  %v2632 = vpop.xlane.xlu0 %2631
  %v2633 = vadd.f32 %v2508, %v2509
  %2634 = vadd.xlane.f32.xlu0 %v2633
  %v2635 = vpop.xlane.xlu0 %2634
  %v2636 = vadd.f32 %v2398, %v2399
  %2637 = vadd.xlane.f32.xlu0 %v2636
  %v2638 = vpop.xlane.xlu0 %2637
  %v2639 = vadd.f32 %v2414, %v2415
  %2640 = vadd.xlane.f32.xlu0 %v2639
  %v2641 = vpop.xlane.xlu0 %2640
  %v2642 = vadd.f32 %v2430, %v2431
  %2643 = vadd.xlane.f32.xlu0 %v2642
  %v2644 = vpop.xlane.xlu0 %2643
  %v2645 = vadd.f32 %v2446, %v2447
  %2646 = vadd.xlane.f32.xlu0 %v2645
  %v2647 = vpop.xlane.xlu0 %2646
  %v2648 = vadd.f32 %v2462, %v2463
  %2649 = vadd.xlane.f32.xlu0 %v2648
  %v2650 = vpop.xlane.xlu0 %2649
  %v2651 = vadd.f32 %v2478, %v2479
  %2652 = vadd.xlane.f32.xlu0 %v2651
  %v2653 = vpop.xlane.xlu0 %2652
  %v2654 = vadd.f32 %v2494, %v2495
  %2655 = vadd.xlane.f32.xlu0 %v2654
  %v2656 = vpop.xlane.xlu0 %2655
  %v2657 = vadd.f32 %v2510, %v2511
  %2658 = vadd.xlane.f32.xlu0 %v2657
  %v2659 = vpop.xlane.xlu0 %2658
  %v2660 = vadd.f32 %v2400, %v2401
  %2661 = vadd.xlane.f32.xlu0 %v2660
  %v2662 = vpop.xlane.xlu0 %2661
  %v2663 = vadd.f32 %v2416, %v2417
  %2664 = vadd.xlane.f32.xlu0 %v2663
  %v2665 = vpop.xlane.xlu0 %2664
  %v2666 = vadd.f32 %v2432, %v2433
  %2667 = vadd.xlane.f32.xlu0 %v2666
  %v2668 = vpop.xlane.xlu0 %2667
  %v2669 = vadd.f32 %v2448, %v2449
  %2670 = vadd.xlane.f32.xlu0 %v2669
  %v2671 = vpop.xlane.xlu0 %2670
  %v2672 = vadd.f32 %v2464, %v2465
  %2673 = vadd.xlane.f32.xlu0 %v2672
  %v2674 = vpop.xlane.xlu0 %2673
  %v2675 = vadd.f32 %v2480, %v2481
  %2676 = vadd.xlane.f32.xlu0 %v2675
  %v2677 = vpop.xlane.xlu0 %2676
  %v2678 = vadd.f32 %v2496, %v2497
  %2679 = vadd.xlane.f32.xlu0 %v2678
  %v2680 = vpop.xlane.xlu0 %2679
  %v2681 = vadd.f32 %v2512, %v2513
  %2682 = vadd.xlane.f32.xlu0 %v2681
  %v2683 = vpop.xlane.xlu0 %2682
  %v2684 = vadd.f32 %v2402, %v2403
  %2685 = vadd.xlane.f32.xlu0 %v2684
  %v2686 = vpop.xlane.xlu0 %2685
  %v2687 = vadd.f32 %v2418, %v2419
  %2688 = vadd.xlane.f32.xlu0 %v2687
  %v2689 = vpop.xlane.xlu0 %2688
  %v2690 = vadd.f32 %v2434, %v2435
  %2691 = vadd.xlane.f32.xlu0 %v2690
  %v2692 = vpop.xlane.xlu0 %2691
  %v2693 = vadd.f32 %v2450, %v2451
  %2694 = vadd.xlane.f32.xlu0 %v2693
  %v2695 = vpop.xlane.xlu0 %2694
  %v2696 = vadd.f32 %v2466, %v2467
  %2697 = vadd.xlane.f32.xlu0 %v2696
  %v2698 = vpop.xlane.xlu0 %2697
  %v2699 = vadd.f32 %v2482, %v2483
  %2700 = vadd.xlane.f32.xlu0 %v2699
  %v2701 = vpop.xlane.xlu0 %2700
  %v2702 = vadd.f32 %v2498, %v2499
  %2703 = vadd.xlane.f32.xlu0 %v2702
  %v2704 = vpop.xlane.xlu0 %2703
  %v2705 = vadd.f32 %v2514, %v2515
  %2706 = vadd.xlane.f32.xlu0 %v2705
  %v2707 = vpop.xlane.xlu0 %2706
  %vm2708 = vcmask 7168
  %v2709 = vsel %vm2708, %v2518, %v2542
  %v2710 = vsel %vm2708, %v2521, %v2545
  %v2711 = vsel %vm2708, %v2524, %v2548
  %v2712 = vsel %vm2708, %v2527, %v2551
  %v2713 = vsel %vm2708, %v2530, %v2554
  %v2714 = vsel %vm2708, %v2533, %v2557
  %v2715 = vsel %vm2708, %v2536, %v2560
  %v2716 = vsel %vm2708, %v2539, %v2563
  %vm2717 = vcmask 15360
  %v2718 = vsel %vm2717, %v2709, %v2566
  %v2719 = vsel %vm2717, %v2710, %v2569
  %v2720 = vsel %vm2717, %v2711, %v2572
  %v2721 = vsel %vm2717, %v2712, %v2575
  %v2722 = vsel %vm2717, %v2713, %v2578
  %v2723 = vsel %vm2717, %v2714, %v2581
  %v2724 = vsel %vm2717, %v2715, %v2584
  %v2725 = vsel %vm2717, %v2716, %v2587
  %vm2726 = vcmask 23552
  %v2727 = vsel %vm2726, %v2718, %v2590
  %v2728 = vsel %vm2726, %v2719, %v2593
  %v2729 = vsel %vm2726, %v2720, %v2596
  %v2730 = vsel %vm2726, %v2721, %v2599
  %v2731 = vsel %vm2726, %v2722, %v2602
  %v2732 = vsel %vm2726, %v2723, %v2605
  %v2733 = vsel %vm2726, %v2724, %v2608
  %v2734 = vsel %vm2726, %v2725, %v2611
  %vm2735 = vcmask 31744
  %v2736 = vsel %vm2735, %v2727, %v2614
  %v2737 = vsel %vm2735, %v2728, %v2617
  %v2738 = vsel %vm2735, %v2729, %v2620
  %v2739 = vsel %vm2735, %v2730, %v2623
  %v2740 = vsel %vm2735, %v2731, %v2626
  %v2741 = vsel %vm2735, %v2732, %v2629
  %v2742 = vsel %vm2735, %v2733, %v2632
  %v2743 = vsel %vm2735, %v2734, %v2635
  %vm2744 = vcmask 39936
  %v2745 = vsel %vm2744, %v2736, %v2638
  %v2746 = vsel %vm2744, %v2737, %v2641
  %v2747 = vsel %vm2744, %v2738, %v2644
  %v2748 = vsel %vm2744, %v2739, %v2647
  %v2749 = vsel %vm2744, %v2740, %v2650
  %v2750 = vsel %vm2744, %v2741, %v2653
  %v2751 = vsel %vm2744, %v2742, %v2656
  %v2752 = vsel %vm2744, %v2743, %v2659
  %vm2753 = vcmask 48128
  %v2754 = vsel %vm2753, %v2745, %v2662
  %v2755 = vsel %vm2753, %v2746, %v2665
  %v2756 = vsel %vm2753, %v2747, %v2668
  %v2757 = vsel %vm2753, %v2748, %v2671
  %v2758 = vsel %vm2753, %v2749, %v2674
  %v2759 = vsel %vm2753, %v2750, %v2677
  %v2760 = vsel %vm2753, %v2751, %v2680
  %v2761 = vsel %vm2753, %v2752, %v2683
  %vm2762 = vcmask 56320
  %v2763 = vsel %vm2762, %v2754, %v2686
  %v2764 = vsel %vm2762, %v2755, %v2689
  %v2765 = vsel %vm2762, %v2756, %v2692
  %v2766 = vsel %vm2762, %v2757, %v2695
  %v2767 = vsel %vm2762, %v2758, %v2698
  %v2768 = vsel %vm2762, %v2759, %v2701
  %v2769 = vsel %vm2762, %v2760, %v2704
  %v2770 = vsel %vm2762, %v2761, %v2707
  %v2771 = vld [vmem:[%s4] sm:$0xff]
  %v2772 = vld [vmem:[%s4 + $0x8] sm:$0x3]
  %v2773 = vld [vmem:[%s5] sm:$0xff]
  %v2774 = vld [vmem:[%s5 + $0x8] sm:$0x3]
  %2776 = vset.pattern.permute.xlu0 0
  %2777 = vperm.xlu0 %2776, %v2773
  %v2778 = vpop.permute.xlu0 %2777
  %2781 = vset.pattern.permute.xlu0 0
  %2782 = vperm.xlu0 %2781, %v2774
  %v2783 = vpop.permute.xlu0 %2782
  %vm2785 = vcmask 523264
  %v2787 = vsel %vm2785, %v2771, 0
  %v2790 = vsel %vm2785, %v2772, 0
  %2792 = vmatprep.subr.mxu0 0.0
  %2793 = vmatpush1.msra.mxu0 %v2763
  %2794 = vmatprep.subr.mxu0 0.0
  %2795 = vmatpush1.msra.mxu0 %v2764
  %2796 = vmatprep.subr.mxu0 0.0
  %2797 = vmatpush1.msra.mxu0 %v2765
  %2798 = vmatprep.subr.mxu0 0.0
  %2799 = vmatpush1.msra.mxu0 %v2766
  %2800 = vmatprep.subr.mxu0 0.0
  %2801 = vmatpush1.msra.mxu0 %v2767
  %2802 = vmatprep.subr.mxu0 0.0
  %2803 = vmatpush1.msra.mxu0 %v2768
  %2804 = vmatprep.subr.mxu0 0.0
  %2805 = vmatpush1.msra.mxu0 %v2769
  %2806 = vmatprep.subr.mxu0 0.0
  %2807 = vmatpush1.msra.mxu0 %v2770
  %2808 = vmatprep.subr.mxu0 0.0
  %2809 = vmatpush1.msra.mxu0 0.0
  %2810 = vmatprep.subr.mxu0 0.0
  %2811 = vmatpush1.msra.mxu0 0.0
  %2812 = vmatprep.subr.mxu0 0.0
  %2813 = vmatpush1.msra.mxu0 0.0
  %2814 = vmatprep.subr.mxu0 0.0
  %2815 = vmatpush1.msra.mxu0 0.0
  %2816 = vmatprep.subr.mxu0 0.0
  %2817 = vmatpush1.msra.mxu0 0.0
  %2818 = vmatprep.subr.mxu0 0.0
  %2819 = vmatpush1.msra.mxu0 0.0
  %2820 = vmatprep.subr.mxu0 0.0
  %2821 = vmatpush1.msra.mxu0 0.0
  %2822 = vmatprep.subr.mxu0 0.0
  %2823 = vmatpush1.msra.mxu0 0.0
  %2824 = vmatprep.subr.mxu0 0.0
  %2825 = vmatpush1.msra.mxu0 0.0
  %2826 = vmatprep.subr.mxu0 0.0
  %2827 = vmatpush1.msra.mxu0 0.0
  %2828 = vmatprep.subr.mxu0 0.0
  %2829 = vmatpush1.msra.mxu0 0.0
  %2830 = vmatprep.subr.mxu0 0.0
  %2831 = vmatpush1.msra.mxu0 0.0
  %2832 = vmatprep.subr.mxu0 0.0
  %2833 = vmatpush1.msra.mxu0 0.0
  %2834 = vmatprep.subr.mxu0 0.0
  %2835 = vmatpush1.msra.mxu0 0.0
  %2836 = vmatprep.subr.mxu0 0.0
  %2837 = vmatpush1.msra.mxu0 0.0
  %2838 = vmatprep.subr.mxu0 0.0
  %2839 = vmatpush1.msra.mxu0 0.0
  %2840 = vmatprep.subr.mxu0 0.0
  %2841 = vmatpush1.msra.mxu0 0.0
  %2842 = vmatprep.subr.mxu0 0.0
  %2843 = vmatpush1.msra.mxu0 0.0
  %2844 = vmatprep.subr.mxu0 0.0
  %2845 = vmatpush1.msra.mxu0 0.0
  %2846 = vmatprep.subr.mxu0 0.0
  %2847 = vmatpush1.msra.mxu0 0.0
  %2848 = vmatprep.subr.mxu0 0.0
  %2849 = vmatpush1.msra.mxu0 0.0
  %2850 = vmatprep.subr.mxu0 0.0
  %2851 = vmatpush1.msra.mxu0 0.0
  %2852 = vmatprep.subr.mxu0 0.0
  %2853 = vmatpush1.msra.mxu0 0.0
  %2854 = vmatprep.subr.mxu0 0.0
  %2855 = vmatpush1.msra.mxu0 0.0
  %2856 = vmatprep.mubr.f32.mxu0 0.0
  %2857 = vmatmul.mubr.f32.gmra.mrb[0].mxu0 %v2787
  %v2858 = vpop.f32.mrb[0].mxu0
  %v2859 = vadd.f32 %v2778, %v2858
  %v2860 = vpop.f32.mrb[0].mxu0
  %2861 = vmatprep.mubr.f32.mxu0 0.0
  %2862 = vmatmul.mubr.f32.gmra.mrb[0].mxu0 %v2790
  %v2863 = vpop.f32.mrb[0].mxu0
  %v2864 = vadd.f32 %v2783, %v2863
  %v2865 = vpop.f32.mrb[0].mxu0
  %2866 = vdwg.mxu0
  %vm2867 = vcmask 64512
  %2868 = vst.msk [vmem:[%s6] sm:$0xff] %vm2867, %v2859
  %vm2869 = vcmask 58368
  %2870 = vst.msk [vmem:[%s6 + $0x8] sm:$0x3] %vm2869, %v2864
  // Predicated region
  $region26: #{model_forward.1} parent=0 // pred_check
    _
  $region27: #{model_forward.1} parent=0 // pred_check_branch
    %2872 = sbr.rel (0) target = $region29
  $region28: #{model_forward.1} parent=0 // pred_region
    _
  $region29: #{model_forward.1} parent=0 // pred_fallthru
    _
  // Predicated region
  $region30: #{model_forward.1} parent=0 // pred_check
    _
  $region31: #{model_forward.1} parent=0 // pred_check_branch
    %2874 = sbr.rel (0) target = $region33
  $region32: #{model_forward.1} parent=0 // pred_region
    _
  $region33: #{model_forward.1} parent=0 // pred_fallthru
    _

</llo_original>
